<compile_context>
chip_gen: v7x
topology: tpu7x:2x2x1
jax: 0.10.0
libtpu: 0.0.40
codegen_flags: <defaults>
</compile_context>

<pallas_src>
import functools
import math

import jax
import jax.numpy as jnp
import numpy as np
from jax import lax
from jax.experimental import pallas as pl
from jax.experimental.pallas import tpu as pltpu

CONFIG = {'n_head': 2, 'hidden_dim': 16, 'batch_size': 3, 'seq_len': 5}


# ---------------------------------------------------------------------------
# Kernel: one invocation does QKV(+rotated)-proj, RoPE, block-diag attention,
# and the output projection for the whole batch.
# ---------------------------------------------------------------------------
def _attn_rope_kernel(xa_ref, wproj_ref, cs_ref, wout_ref, o_ref, *,
                      n_head, head_dim, rows, seq_len):
    H, D, S = n_head, head_dim, seq_len
    f32 = jnp.float32

    xa = xa_ref[...]            # [rows, F+1]; last column is 1.0 -> folds biases
    cos = cs_ref[0]             # [rows, D]
    sin = cs_ref[1]             # [rows, D]

    # Per-(head, quantity) projections.  Weight slab index = 5*h + i with
    # i in {0: q*scale, 1: k, 2: v, 3: rev(q)*scale, 4: rev(k)} (rev == the
    # rotate_half signed permutation, pre-applied to the weights).  Every
    # result starts at lane 0 -> zero XLU lane shuffles; extra MXU pushes are
    # free at this size on all generations.
    q_rot, k_rot, v_heads = [], [], []
    for h in range(H):
        b = 5 * h
        q = jnp.dot(xa, wproj_ref[b + 0], preferred_element_type=f32)
        k = jnp.dot(xa, wproj_ref[b + 1], preferred_element_type=f32)
        v = jnp.dot(xa, wproj_ref[b + 2], preferred_element_type=f32)
        qr = jnp.dot(xa, wproj_ref[b + 3], preferred_element_type=f32)
        kr = jnp.dot(xa, wproj_ref[b + 4], preferred_element_type=f32)
        q_rot.append(q * cos + qr * sin)       # RoPE (pure VPU FMAs)
        k_rot.append(k * cos + kr * sin)
        v_heads.append(v)

    # Pack heads along the ROW axis: sublane concat at multiples of 8 (free).
    qp = jnp.concatenate(q_rot, axis=0)        # [H*rows, D]
    kp = jnp.concatenate(k_rot, axis=0)
    vp = jnp.concatenate(v_heads, axis=0)

    HR = H * rows
    # QK^T without materializing k^T (NT dimension numbers).
    s = lax.dot_general(qp, kp, dimension_numbers=(((1,), (1,)), ((), ())),
                        preferred_element_type=f32)              # [HR, HR]

    # Block-diagonal (head, batch) mask built in-kernel from iota + static
    # boundary compares (no int division, no extra DMA).  Pad rows always land
    # in their own group because B*N is an exact multiple of N (asserted in the
    # wrapper), so they never attend to / are attended by real rows.
    gph = (rows + S - 1) // S                  # groups per head (incl. pad group)
    boundaries = [h * rows + g * S for h in range(H) for g in range(gph)][1:]
    ridx = lax.broadcasted_iota(jnp.int32, (HR, 1), 0)
    cidx = lax.broadcasted_iota(jnp.int32, (1, HR), 1)
    gid_r = jnp.zeros((HR, 1), jnp.int32)
    gid_c = jnp.zeros((1, HR), jnp.int32)
    for e in boundaries:
        gid_r = gid_r + (ridx >= e).astype(jnp.int32)
        gid_c = gid_c + (cidx >= e).astype(jnp.int32)
    s = jnp.where(gid_r == gid_c, s, -1e30)

    # Softmax.  Normalization applied AFTER the PV matmul ([HR, D] instead of
    # [HR, HR]) and with an exact reciprocal (only HR values).
    s = s - jnp.max(s, axis=-1, keepdims=True)
    p = jnp.exp(s)
    l = jnp.sum(p, axis=-1, keepdims=True)                        # [HR, 1]
    o = jnp.dot(p, vp, preferred_element_type=f32)                # [HR, D]
    o = o / l

    # Output projection per head + bias row: only sublane-aligned slices,
    # no lane concat of the heads.
    out = wout_ref[H * D:H * D + 1, :]                            # [1, F] bias
    for h in range(H):
        out = out + jnp.dot(o[h * rows:(h + 1) * rows, :],
                            wout_ref[h * D:(h + 1) * D, :],
                            preferred_element_type=f32)
    o_ref[...] = out.astype(o_ref.dtype)


# ---------------------------------------------------------------------------
# RoPE tables (matches the PyTorch Rotator exactly)
# ---------------------------------------------------------------------------
def _make_rope_tables(D, position_ids):
    base = 10000.0
    d = D / 2
    Bexp = base ** (1.0 / d)
    theta_base = 1.0 / (Bexp ** jnp.arange(0, int(d), dtype=jnp.float32))
    thetas = jnp.outer(position_ids.astype(jnp.float32), theta_base)   # [N, D/2]
    full = jnp.concatenate([thetas, thetas], axis=-1)                  # [N, D]
    return jnp.cos(full), jnp.sin(full)


# ---------------------------------------------------------------------------
# One-time weight prep (host-side numpy, cached at module init)
# ---------------------------------------------------------------------------
def _prepare_weights(params, n_head):
    w_qkv = np.asarray(params['w_qkv'], np.float32)    # [3F, F]
    b_qkv = np.asarray(params['b_qkv'], np.float32)    # [3F]
    w_out = np.asarray(params['w_out'], np.float32)    # [F, F]
    b_out = np.asarray(params['b_out'], np.float32)    # [F]
    F = w_out.shape[0]
    H = n_head
    D = F // H
    scale = 1.0 / math.sqrt(D)

    WT = w_qkv.T                                       # [F, 3F]
    WqT, WkT, WvT = WT[:, :F], WT[:, F:2 * F], WT[:, 2 * F:3 * F]
    bq, bk, bv = b_qkv[:F], b_qkv[F:2 * F], b_qkv[2 * F:3 * F]

    # reverse_half as a right-multiplication (signed permutation): q @ R == cat(-v, u)
    half = D // 2
    R = np.zeros((D, D), np.float32)
    R[half:, :half] = -np.eye(half, dtype=np.float32)
    R[:half, half:] = np.eye(half, dtype=np.float32)

    slabs = []
    for h in range(H):
        sl = slice(h * D, (h + 1) * D)
        pairs = [
            (scale * WqT[:, sl],       scale * bq[sl]),         # q (pre-scaled)
            (WkT[:, sl],               bk[sl]),                 # k
            (WvT[:, sl],               bv[sl]),                 # v
            (scale * (WqT[:, sl] @ R), scale * (bq[sl] @ R)),   # rev(q) (pre-scaled)
            (WkT[:, sl] @ R,           bk[sl] @ R),             # rev(k)
        ]
        for W, b in pairs:
            slabs.append(np.concatenate([W, b[None, :]], axis=0))   # [F+1, D]

    w_proj = jnp.asarray(np.stack(slabs, axis=0))                   # [5H, F+1, D]
    w_out_aug = jnp.asarray(
        np.concatenate([w_out.T, b_out[None, :]], axis=0))          # [H*D+1, F]
    return w_proj, w_out_aug


# ---------------------------------------------------------------------------
# Jitted forward (everything here is traced into one XLA program)
# ---------------------------------------------------------------------------
def _forward_impl(x, position_ids, w_proj, w_out_aug, *, n_head):
    B, N, F = x.shape
    H = n_head
    D = F // H
    BN = B * N
    rows = ((BN + 7) // 8) * 8            # pad flattened rows to a sublane multiple
    # Pad rows must never share a (batch) group with real rows; guaranteed since
    # BN is an exact multiple of N and padding is appended after all real rows.
    assert BN % N == 0

    # RoPE tables tiled to the flattened (batch*seq) row layout.
    cos_b, sin_b = _make_rope_tables(D, position_ids)    # [N, D]
    row_pos = np.arange(rows) % N                        # static gather indices
    cos_sin = jnp.stack([cos_b[row_pos], sin_b[row_pos]], axis=0)   # [2, rows, D]

    # Flatten x, append ones column (folds biases), pad rows.
    x2d = x.reshape(BN, F)
    xa = jnp.concatenate([x2d, jnp.ones((BN, 1), x.dtype)], axis=1)
    xa = jnp.pad(xa, ((0, rows - BN), (0, 0)))           # [rows, F+1]

    kernel = functools.partial(_attn_rope_kernel, n_head=H, head_dim=D,
                               rows=rows, seq_len=N)
    vmem = pl.BlockSpec(memory_space=pltpu.MemorySpace.VMEM)

    out = pl.pallas_call(
        kernel,
        out_shape=jax.ShapeDtypeStruct((rows, F), x.dtype),
        in_specs=[vmem, vmem, vmem, vmem],
        out_specs=vmem,
    )(xa, w_proj, cos_sin, w_out_aug)

    return out[:BN].reshape(B, N, F)


class SelfAttentionWithRoPE:
    """Pallas-backed equivalent of the PyTorch module (weights passed in)."""

    def __init__(self, config, params):
        self.H = config['n_head']
        self.w_proj, self.w_out_aug = _prepare_weights(params, self.H)
        self._fwd = jax.jit(functools.partial(_forward_impl, n_head=self.H))

    def __call__(self, x, position_ids):
        return self._fwd(x, position_ids, self.w_proj, self.w_out_aug)


# ---------------------------------------------------------------------------
# Pure-JAX reference (mirrors the PyTorch forward)
# ---------------------------------------------------------------------------
def reference(x, position_ids, params, n_head):
    B, N, F = x.shape
    D = F // n_head
    qkv = x @ params['w_qkv'].T + params['b_qkv']
    q, k, v = jnp.split(qkv, 3, axis=-1)

    def to_heads(t):
        return t.reshape(B, N, n_head, D).transpose(0, 2, 1, 3)

    q, k, v = to_heads(q), to_heads(k), to_heads(v)
    cos, sin = _make_rope_tables(D, position_ids)

    def rot(t):
        u = t[..., :D // 2]
        w = t[..., D // 2:]
        rev = jnp.concatenate([-w, u], axis=-1)
        return t * cos + rev * sin

    q, k = rot(q), rot(k)
    att = (q @ jnp.swapaxes(k, -2, -1)) * (1.0 / math.sqrt(D))
    att = jax.nn.softmax(att, axis=-1)
    y = att @ v
    y = y.transpose(0, 2, 1, 3).reshape(B, N, F)
    return y @ params['w_out'].T + params['b_out']


# ---------------------------------------------------------------------------
if __name__ == "__main__":
    H = CONFIG['n_head']
    F = CONFIG['hidden_dim']
    B = CONFIG['batch_size']
    N = CONFIG['seq_len']

    key = jax.random.PRNGKey(0)
    kx, k1, k2, k3, k4 = jax.random.split(key, 5)

    x = jax.random.uniform(kx, (B, N, F), dtype=jnp.float32)
    position_ids = jnp.arange(N, dtype=jnp.int32)

    bound = 1.0 / math.sqrt(F)
    params = {
        'w_qkv': jax.random.uniform(k1, (3 * F, F), jnp.float32, -bound, bound),
        'b_qkv': jax.random.uniform(k2, (3 * F,), jnp.float32, -bound, bound),
        'w_out': jax.random.uniform(k3, (F, F), jnp.float32, -bound, bound),
        'b_out': jax.random.uniform(k4, (F,), jnp.float32, -bound, bound),
    }

    attn = SelfAttentionWithRoPE(CONFIG, params)
    y = attn(x, position_ids)
    y = jax.block_until_ready(y)

    y_ref = reference(x, position_ids, params, H)
    np.testing.assert_allclose(np.asarray(y), np.asarray(y_ref),
                               rtol=1e-5, atol=1e-5)

    print("KERNEL_OK")
</pallas_src>

<mosaic_0001>
module attributes {stable_mosaic.version = 11 : i64} {
  func.func @_attn_rope_kernel(%arg0: memref<16x17xf32, #tpu.memory_space<vmem>>, %arg1: memref<10x17x8xf32, #tpu.memory_space<vmem>>, %arg2: memref<2x16x8xf32, #tpu.memory_space<vmem>>, %arg3: memref<17x16xf32, #tpu.memory_space<vmem>>, %arg4: memref<16x16xf32, #tpu.memory_space<vmem>>) attributes {dimension_semantics = [], scalar_prefetch = 0 : i64, scratch_operands = 0 : i64, tpu.core_type = #tpu.core_type<tc>} {
    %c0 = arith.constant 0 : index
    %c0_0 = arith.constant 0 : index
    %0 = vector.load %arg0[%c0, %c0_0] : memref<16x17xf32, #tpu.memory_space<vmem>>, vector<16x17xf32>
    %c0_1 = arith.constant 0 : index
    %c0_2 = arith.constant 0 : index
    %c0_3 = arith.constant 0 : index
    %1 = vector.load %arg2[%c0_1, %c0_2, %c0_3] : memref<2x16x8xf32, #tpu.memory_space<vmem>>, vector<1x16x8xf32>
    %2 = vector.shape_cast %1 : vector<1x16x8xf32> to vector<16x8xf32>
    %c1 = arith.constant 1 : index
    %c0_4 = arith.constant 0 : index
    %c0_5 = arith.constant 0 : index
    %3 = vector.load %arg2[%c1, %c0_4, %c0_5] : memref<2x16x8xf32, #tpu.memory_space<vmem>>, vector<1x16x8xf32>
    %4 = vector.shape_cast %3 : vector<1x16x8xf32> to vector<16x8xf32>
    %c0_6 = arith.constant 0 : index
    %c0_7 = arith.constant 0 : index
    %c0_8 = arith.constant 0 : index
    %5 = vector.load %arg1[%c0_6, %c0_7, %c0_8] : memref<10x17x8xf32, #tpu.memory_space<vmem>>, vector<1x17x8xf32>
    %6 = vector.shape_cast %5 : vector<1x17x8xf32> to vector<17x8xf32>
    %cst = arith.constant dense<0.000000e+00> : vector<16x8xf32>
    %7 = tpu.matmul %0, %6, %cst {dimension_numbers = #tpu.dot_dimension_numbers<[1], [0], [0], [1], [0, 0, 1, 1], [], []>} : vector<16x17xf32>, vector<17x8xf32>, vector<16x8xf32> -> vector<16x8xf32>
    %c1_9 = arith.constant 1 : index
    %c0_10 = arith.constant 0 : index
    %c0_11 = arith.constant 0 : index
    %8 = vector.load %arg1[%c1_9, %c0_10, %c0_11] : memref<10x17x8xf32, #tpu.memory_space<vmem>>, vector<1x17x8xf32>
    %9 = vector.shape_cast %8 : vector<1x17x8xf32> to vector<17x8xf32>
    %cst_12 = arith.constant dense<0.000000e+00> : vector<16x8xf32>
    %10 = tpu.matmul %0, %9, %cst_12 {dimension_numbers = #tpu.dot_dimension_numbers<[1], [0], [0], [1], [0, 0, 1, 1], [], []>} : vector<16x17xf32>, vector<17x8xf32>, vector<16x8xf32> -> vector<16x8xf32>
    %c2 = arith.constant 2 : index
    %c0_13 = arith.constant 0 : index
    %c0_14 = arith.constant 0 : index
    %11 = vector.load %arg1[%c2, %c0_13, %c0_14] : memref<10x17x8xf32, #tpu.memory_space<vmem>>, vector<1x17x8xf32>
    %12 = vector.shape_cast %11 : vector<1x17x8xf32> to vector<17x8xf32>
    %cst_15 = arith.constant dense<0.000000e+00> : vector<16x8xf32>
    %13 = tpu.matmul %0, %12, %cst_15 {dimension_numbers = #tpu.dot_dimension_numbers<[1], [0], [0], [1], [0, 0, 1, 1], [], []>} : vector<16x17xf32>, vector<17x8xf32>, vector<16x8xf32> -> vector<16x8xf32>
    %c3 = arith.constant 3 : index
    %c0_16 = arith.constant 0 : index
    %c0_17 = arith.constant 0 : index
    %14 = vector.load %arg1[%c3, %c0_16, %c0_17] : memref<10x17x8xf32, #tpu.memory_space<vmem>>, vector<1x17x8xf32>
    %15 = vector.shape_cast %14 : vector<1x17x8xf32> to vector<17x8xf32>
    %cst_18 = arith.constant dense<0.000000e+00> : vector<16x8xf32>
    %16 = tpu.matmul %0, %15, %cst_18 {dimension_numbers = #tpu.dot_dimension_numbers<[1], [0], [0], [1], [0, 0, 1, 1], [], []>} : vector<16x17xf32>, vector<17x8xf32>, vector<16x8xf32> -> vector<16x8xf32>
    %c4 = arith.constant 4 : index
    %c0_19 = arith.constant 0 : index
    %c0_20 = arith.constant 0 : index
    %17 = vector.load %arg1[%c4, %c0_19, %c0_20] : memref<10x17x8xf32, #tpu.memory_space<vmem>>, vector<1x17x8xf32>
    %18 = vector.shape_cast %17 : vector<1x17x8xf32> to vector<17x8xf32>
    %cst_21 = arith.constant dense<0.000000e+00> : vector<16x8xf32>
    %19 = tpu.matmul %0, %18, %cst_21 {dimension_numbers = #tpu.dot_dimension_numbers<[1], [0], [0], [1], [0, 0, 1, 1], [], []>} : vector<16x17xf32>, vector<17x8xf32>, vector<16x8xf32> -> vector<16x8xf32>
    %20 = arith.mulf %7, %2 : vector<16x8xf32>
    %21 = arith.mulf %16, %4 : vector<16x8xf32>
    %22 = arith.addf %20, %21 : vector<16x8xf32>
    %23 = arith.mulf %10, %2 : vector<16x8xf32>
    %24 = arith.mulf %19, %4 : vector<16x8xf32>
    %25 = arith.addf %23, %24 : vector<16x8xf32>
    %c5 = arith.constant 5 : index
    %c0_22 = arith.constant 0 : index
    %c0_23 = arith.constant 0 : index
    %26 = vector.load %arg1[%c5, %c0_22, %c0_23] : memref<10x17x8xf32, #tpu.memory_space<vmem>>, vector<1x17x8xf32>
    %27 = vector.shape_cast %26 : vector<1x17x8xf32> to vector<17x8xf32>
    %cst_24 = arith.constant dense<0.000000e+00> : vector<16x8xf32>
    %28 = tpu.matmul %0, %27, %cst_24 {dimension_numbers = #tpu.dot_dimension_numbers<[1], [0], [0], [1], [0, 0, 1, 1], [], []>} : vector<16x17xf32>, vector<17x8xf32>, vector<16x8xf32> -> vector<16x8xf32>
    %c6 = arith.constant 6 : index
    %c0_25 = arith.constant 0 : index
    %c0_26 = arith.constant 0 : index
    %29 = vector.load %arg1[%c6, %c0_25, %c0_26] : memref<10x17x8xf32, #tpu.memory_space<vmem>>, vector<1x17x8xf32>
    %30 = vector.shape_cast %29 : vector<1x17x8xf32> to vector<17x8xf32>
    %cst_27 = arith.constant dense<0.000000e+00> : vector<16x8xf32>
    %31 = tpu.matmul %0, %30, %cst_27 {dimension_numbers = #tpu.dot_dimension_numbers<[1], [0], [0], [1], [0, 0, 1, 1], [], []>} : vector<16x17xf32>, vector<17x8xf32>, vector<16x8xf32> -> vector<16x8xf32>
    %c7 = arith.constant 7 : index
    %c0_28 = arith.constant 0 : index
    %c0_29 = arith.constant 0 : index
    %32 = vector.load %arg1[%c7, %c0_28, %c0_29] : memref<10x17x8xf32, #tpu.memory_space<vmem>>, vector<1x17x8xf32>
    %33 = vector.shape_cast %32 : vector<1x17x8xf32> to vector<17x8xf32>
    %cst_30 = arith.constant dense<0.000000e+00> : vector<16x8xf32>
    %34 = tpu.matmul %0, %33, %cst_30 {dimension_numbers = #tpu.dot_dimension_numbers<[1], [0], [0], [1], [0, 0, 1, 1], [], []>} : vector<16x17xf32>, vector<17x8xf32>, vector<16x8xf32> -> vector<16x8xf32>
    %c8 = arith.constant 8 : index
    %c0_31 = arith.constant 0 : index
    %c0_32 = arith.constant 0 : index
    %35 = vector.load %arg1[%c8, %c0_31, %c0_32] : memref<10x17x8xf32, #tpu.memory_space<vmem>>, vector<1x17x8xf32>
    %36 = vector.shape_cast %35 : vector<1x17x8xf32> to vector<17x8xf32>
    %cst_33 = arith.constant dense<0.000000e+00> : vector<16x8xf32>
    %37 = tpu.matmul %0, %36, %cst_33 {dimension_numbers = #tpu.dot_dimension_numbers<[1], [0], [0], [1], [0, 0, 1, 1], [], []>} : vector<16x17xf32>, vector<17x8xf32>, vector<16x8xf32> -> vector<16x8xf32>
    %c9 = arith.constant 9 : index
    %c0_34 = arith.constant 0 : index
    %c0_35 = arith.constant 0 : index
    %38 = vector.load %arg1[%c9, %c0_34, %c0_35] : memref<10x17x8xf32, #tpu.memory_space<vmem>>, vector<1x17x8xf32>
    %39 = vector.shape_cast %38 : vector<1x17x8xf32> to vector<17x8xf32>
    %cst_36 = arith.constant dense<0.000000e+00> : vector<16x8xf32>
    %40 = tpu.matmul %0, %39, %cst_36 {dimension_numbers = #tpu.dot_dimension_numbers<[1], [0], [0], [1], [0, 0, 1, 1], [], []>} : vector<16x17xf32>, vector<17x8xf32>, vector<16x8xf32> -> vector<16x8xf32>
    %41 = arith.mulf %28, %2 : vector<16x8xf32>
    %42 = arith.mulf %37, %4 : vector<16x8xf32>
    %43 = arith.addf %41, %42 : vector<16x8xf32>
    %44 = arith.mulf %31, %2 : vector<16x8xf32>
    %45 = arith.mulf %40, %4 : vector<16x8xf32>
    %46 = arith.addf %44, %45 : vector<16x8xf32>
    %47 = tpu.concatenate %22, %43 in 0 : vector<16x8xf32>, vector<16x8xf32> -> vector<32x8xf32>
    %48 = tpu.concatenate %25, %46 in 0 : vector<16x8xf32>, vector<16x8xf32> -> vector<32x8xf32>
    %49 = tpu.concatenate %13, %34 in 0 : vector<16x8xf32>, vector<16x8xf32> -> vector<32x8xf32>
    %cst_37 = arith.constant dense<0.000000e+00> : vector<32x32xf32>
    %50 = tpu.matmul %47, %48, %cst_37 {dimension_numbers = #tpu.dot_dimension_numbers<[1], [1], [0], [0], [0, 0, 1, 0], [], []>} : vector<32x8xf32>, vector<32x8xf32>, vector<32x32xf32> -> vector<32x32xf32>
    %51 = tpu.iota {dimensions = array<i32: 0>} : vector<32x1xi32>
    %52 = tpu.iota {dimensions = array<i32: 1>} : vector<1x32xi32>
    %c0_i32 = arith.constant 0 : i32
    %53 = vector.broadcast %c0_i32 : i32 to vector<32x1xi32>
    %c0_i32_38 = arith.constant 0 : i32
    %54 = vector.broadcast %c0_i32_38 : i32 to vector<1x32xi32>
    %c5_i32 = arith.constant 5 : i32
    %55 = vector.broadcast %c5_i32 : i32 to vector<32x1xi32>
    %56 = arith.cmpi sge, %51, %55 : vector<32x1xi32>
    %57 = arith.extui %56 : vector<32x1xi1> to vector<32x1xi32>
    %58 = arith.addi %53, %57 : vector<32x1xi32>
    %c5_i32_39 = arith.constant 5 : i32
    %59 = vector.broadcast %c5_i32_39 : i32 to vector<1x32xi32>
    %60 = arith.cmpi sge, %52, %59 : vector<1x32xi32>
    %61 = arith.extui %60 : vector<1x32xi1> to vector<1x32xi32>
    %62 = arith.addi %54, %61 : vector<1x32xi32>
    %c10_i32 = arith.constant 10 : i32
    %63 = vector.broadcast %c10_i32 : i32 to vector<32x1xi32>
    %64 = arith.cmpi sge, %51, %63 : vector<32x1xi32>
    %65 = arith.extui %64 : vector<32x1xi1> to vector<32x1xi32>
    %66 = arith.addi %58, %65 : vector<32x1xi32>
    %c10_i32_40 = arith.constant 10 : i32
    %67 = vector.broadcast %c10_i32_40 : i32 to vector<1x32xi32>
    %68 = arith.cmpi sge, %52, %67 : vector<1x32xi32>
    %69 = arith.extui %68 : vector<1x32xi1> to vector<1x32xi32>
    %70 = arith.addi %62, %69 : vector<1x32xi32>
    %c15_i32 = arith.constant 15 : i32
    %71 = vector.broadcast %c15_i32 : i32 to vector<32x1xi32>
    %72 = arith.cmpi sge, %51, %71 : vector<32x1xi32>
    %73 = arith.extui %72 : vector<32x1xi1> to vector<32x1xi32>
    %74 = arith.addi %66, %73 : vector<32x1xi32>
    %c15_i32_41 = arith.constant 15 : i32
    %75 = vector.broadcast %c15_i32_41 : i32 to vector<1x32xi32>
    %76 = arith.cmpi sge, %52, %75 : vector<1x32xi32>
    %77 = arith.extui %76 : vector<1x32xi1> to vector<1x32xi32>
    %78 = arith.addi %70, %77 : vector<1x32xi32>
    %c16_i32 = arith.constant 16 : i32
    %79 = vector.broadcast %c16_i32 : i32 to vector<32x1xi32>
    %80 = arith.cmpi sge, %51, %79 : vector<32x1xi32>
    %81 = arith.extui %80 : vector<32x1xi1> to vector<32x1xi32>
    %82 = arith.addi %74, %81 : vector<32x1xi32>
    %c16_i32_42 = arith.constant 16 : i32
    %83 = vector.broadcast %c16_i32_42 : i32 to vector<1x32xi32>
    %84 = arith.cmpi sge, %52, %83 : vector<1x32xi32>
    %85 = arith.extui %84 : vector<1x32xi1> to vector<1x32xi32>
    %86 = arith.addi %78, %85 : vector<1x32xi32>
    %c21_i32 = arith.constant 21 : i32
    %87 = vector.broadcast %c21_i32 : i32 to vector<32x1xi32>
    %88 = arith.cmpi sge, %51, %87 : vector<32x1xi32>
    %89 = arith.extui %88 : vector<32x1xi1> to vector<32x1xi32>
    %90 = arith.addi %82, %89 : vector<32x1xi32>
    %c21_i32_43 = arith.constant 21 : i32
    %91 = vector.broadcast %c21_i32_43 : i32 to vector<1x32xi32>
    %92 = arith.cmpi sge, %52, %91 : vector<1x32xi32>
    %93 = arith.extui %92 : vector<1x32xi1> to vector<1x32xi32>
    %94 = arith.addi %86, %93 : vector<1x32xi32>
    %c26_i32 = arith.constant 26 : i32
    %95 = vector.broadcast %c26_i32 : i32 to vector<32x1xi32>
    %96 = arith.cmpi sge, %51, %95 : vector<32x1xi32>
    %97 = arith.extui %96 : vector<32x1xi1> to vector<32x1xi32>
    %98 = arith.addi %90, %97 : vector<32x1xi32>
    %c26_i32_44 = arith.constant 26 : i32
    %99 = vector.broadcast %c26_i32_44 : i32 to vector<1x32xi32>
    %100 = arith.cmpi sge, %52, %99 : vector<1x32xi32>
    %101 = arith.extui %100 : vector<1x32xi1> to vector<1x32xi32>
    %102 = arith.addi %94, %101 : vector<1x32xi32>
    %c31_i32 = arith.constant 31 : i32
    %103 = vector.broadcast %c31_i32 : i32 to vector<32x1xi32>
    %104 = arith.cmpi sge, %51, %103 : vector<32x1xi32>
    %105 = arith.extui %104 : vector<32x1xi1> to vector<32x1xi32>
    %106 = arith.addi %98, %105 : vector<32x1xi32>
    %c31_i32_45 = arith.constant 31 : i32
    %107 = vector.broadcast %c31_i32_45 : i32 to vector<1x32xi32>
    %108 = arith.cmpi sge, %52, %107 : vector<1x32xi32>
    %109 = arith.extui %108 : vector<1x32xi1> to vector<1x32xi32>
    %110 = arith.addi %102, %109 : vector<1x32xi32>
    %111 = vector.broadcast %106 : vector<32x1xi32> to vector<32x32xi32>
    %112 = vector.broadcast %110 : vector<1x32xi32> to vector<32x32xi32>
    %113 = arith.cmpi eq, %111, %112 : vector<32x32xi32>
    %cst_46 = arith.constant -1.000000e+30 : f32
    %114 = vector.broadcast %cst_46 : f32 to vector<32x32xf32>
    %115 = arith.select %113, %50, %114 : vector<32x32xi1>, vector<32x32xf32>
    %cst_47 = arith.constant dense<0xFF800000> : vector<32xf32>
    %116 = vector.multi_reduction <maximumf>, %115, %cst_47 [1] : vector<32x32xf32> to vector<32xf32>
    %117 = vector.shape_cast %116 : vector<32xf32> to vector<32x1xf32>
    %118 = vector.broadcast %117 : vector<32x1xf32> to vector<32x32xf32>
    %119 = arith.subf %115, %118 : vector<32x32xf32>
    %120 = math.exp %119 : vector<32x32xf32>
    %cst_48 = arith.constant dense<0.000000e+00> : vector<32xf32>
    %121 = vector.multi_reduction <add>, %120, %cst_48 [1] : vector<32x32xf32> to vector<32xf32>
    %122 = vector.shape_cast %121 : vector<32xf32> to vector<32x1xf32>
    %cst_49 = arith.constant dense<0.000000e+00> : vector<32x8xf32>
    %123 = tpu.matmul %120, %49, %cst_49 {dimension_numbers = #tpu.dot_dimension_numbers<[1], [0], [0], [1], [0, 0, 1, 1], [], []>} : vector<32x32xf32>, vector<32x8xf32>, vector<32x8xf32> -> vector<32x8xf32>
    %124 = vector.broadcast %122 : vector<32x1xf32> to vector<32x8xf32>
    %125 = arith.divf %123, %124 : vector<32x8xf32>
    %c16 = arith.constant 16 : index
    %c0_50 = arith.constant 0 : index
    %126 = vector.load %arg3[%c16, %c0_50] : memref<17x16xf32, #tpu.memory_space<vmem>>, vector<1x16xf32>
    %127 = vector.extract_strided_slice %125 {offsets = [0, 0], sizes = [16, 8], strides = [1, 1]} : vector<32x8xf32> to vector<16x8xf32>
    %c0_51 = arith.constant 0 : index
    %c0_52 = arith.constant 0 : index
    %128 = vector.load %arg3[%c0_51, %c0_52] : memref<17x16xf32, #tpu.memory_space<vmem>>, vector<8x16xf32>
    %cst_53 = arith.constant dense<0.000000e+00> : vector<16x16xf32>
    %129 = tpu.matmul %127, %128, %cst_53 {dimension_numbers = #tpu.dot_dimension_numbers<[1], [0], [0], [1], [0, 0, 1, 1], [], []>} : vector<16x8xf32>, vector<8x16xf32>, vector<16x16xf32> -> vector<16x16xf32>
    %130 = vector.broadcast %126 : vector<1x16xf32> to vector<16x16xf32>
    %131 = arith.addf %130, %129 : vector<16x16xf32>
    %132 = vector.extract_strided_slice %125 {offsets = [16, 0], sizes = [16, 8], strides = [1, 1]} : vector<32x8xf32> to vector<16x8xf32>
    %c8_54 = arith.constant 8 : index
    %c0_55 = arith.constant 0 : index
    %133 = vector.load %arg3[%c8_54, %c0_55] : memref<17x16xf32, #tpu.memory_space<vmem>>, vector<8x16xf32>
    %cst_56 = arith.constant dense<0.000000e+00> : vector<16x16xf32>
    %134 = tpu.matmul %132, %133, %cst_56 {dimension_numbers = #tpu.dot_dimension_numbers<[1], [0], [0], [1], [0, 0, 1, 1], [], []>} : vector<16x8xf32>, vector<8x16xf32>, vector<16x16xf32> -> vector<16x16xf32>
    %135 = arith.addf %131, %134 : vector<16x16xf32>
    %c0_57 = arith.constant 0 : index
    %c0_58 = arith.constant 0 : index
    %136 = vector.load %arg4[%c0_57, %c0_58] : memref<16x16xf32, #tpu.memory_space<vmem>>, vector<16x16xf32>
    tpu.vector_store %arg4[%c0_57, %c0_58], %135 {strides = array<i32>} : memref<16x16xf32, #tpu.memory_space<vmem>>, vector<16x16xf32>,
    return
  }
}

</mosaic_0001>

<llo_original>
// kernel: _forward_impl.1
$region0: #{_forward_impl.1}
  #allocation0 [shape = 'u32[]', space=smem, size = 0x4, offset = 0x4, fixed_abs, tag = 'smem constant byte address 0x4 - core index']
  #allocation1 [shape = 'u32[144,128]{1,0:T(1,128)}', space=vmem, size = 0x12000, scoped, tag = 'internal scratch']
  %s0 = inlined_call_operand.vmem [shape: f32[16,17], index: 0, kind: input, shape index: {}]
  %s1 = inlined_call_operand.vmem [shape: f32[10,17,8], index: 1, kind: input, shape index: {}]
  %s2 = inlined_call_operand.vmem [shape: f32[2,16,8], index: 2, kind: input, shape index: {}]
  %s3 = inlined_call_operand.vmem [shape: f32[17,16], index: 3, kind: input, shape index: {}]
  %s4 = inlined_call_operand.vmem [shape: f32[16,16], index: 4, kind: output, shape index: {}]
  %s5 = sld [smem:[#allocation0]]
  $region26: #{_forward_impl.1} parent=0
    _
  %s7 = ssub.s32 1, %s5
  %s8 = scalar_select 0, %s7, %s5
  // Predicated region
  $region2: #{_forward_impl.1} parent=0 // pred_check
    _
  $region3: #{_forward_impl.1} parent=0 // pred_check_branch
    %10 = sbr.rel (0) target = $region5
  $region4: #{_forward_impl.1} parent=0 // pred_region
    _
  $region5: #{_forward_impl.1} parent=0 // pred_fallthru
    _
  // Predicated region
  $region6: #{_forward_impl.1} parent=0 // pred_check
    _
  $region7: #{_forward_impl.1} parent=0 // pred_check_branch
    %12 = sbr.rel (0) target = $region9
  $region8: #{_forward_impl.1} parent=0 // pred_region
    _
  $region9: #{_forward_impl.1} parent=0 // pred_fallthru
    _
  // Predicated region
  $region10: #{_forward_impl.1} parent=0 // pred_check
    _
  $region11: #{_forward_impl.1} parent=0 // pred_check_branch
    %14 = sbr.rel (0) target = $region13
  $region12: #{_forward_impl.1} parent=0 // pred_region
    _
  $region13: #{_forward_impl.1} parent=0 // pred_fallthru
    _
  // Predicated region
  $region14: #{_forward_impl.1} parent=0 // pred_check
    _
  $region15: #{_forward_impl.1} parent=0 // pred_check_branch
    %16 = sbr.rel (0) target = $region17
  $region16: #{_forward_impl.1} parent=0 // pred_region
    _
  $region17: #{_forward_impl.1} parent=0 // pred_fallthru
    _
  %v17 = vld [vmem:[%s0] sm:$0xff]
  %v18 = vld [vmem:[%s0 + $0x8] sm:$0xff]
  %v19 = vld [vmem:[%s2] sm:$0xff]
  %v20 = vld [vmem:[%s2 + $0x8] sm:$0xff]
  %s21 = scalar_lea.vmem %s2, 16
  %v22 = vld [vmem:[%s21] sm:$0xff]
  %v23 = vld [vmem:[%s21 + $0x8] sm:$0xff]
  %v24 = vld [vmem:[%s1] sm:$0xff]
  %v25 = vld [vmem:[%s1 + $0x8] sm:$0xff]
  %v26 = vld [vmem:[%s1 + $0x10] sm:$0x1]
  %vm27 = vcmask 138240
  %v29 = vsel %vm27, %v17, 0
  %v32 = vsel %vm27, %v18, 0
  %vm34 = vcmask 1040384
  %v36 = vsel %vm34, %v26, 0
  %38 = vmatprep.subr.mxu0 0.0
  %39 = vmatpush1.msra.mxu0 %v24
  %40 = vmatprep.subr.mxu0 0.0
  %41 = vmatpush1.msra.mxu0 %v25
  %42 = vmatprep.subr.mxu0 0.0
  %43 = vmatpush1.msra.mxu0 %v36
  %44 = vmatprep.subr.mxu0 0.0
  %45 = vmatpush1.msra.mxu0 0.0
  %46 = vmatprep.subr.mxu0 0.0
  %47 = vmatpush1.msra.mxu0 0.0
  %48 = vmatprep.subr.mxu0 0.0
  %49 = vmatpush1.msra.mxu0 0.0
  %50 = vmatprep.subr.mxu0 0.0
  %51 = vmatpush1.msra.mxu0 0.0
  %52 = vmatprep.subr.mxu0 0.0
  %53 = vmatpush1.msra.mxu0 0.0
  %54 = vmatprep.subr.mxu0 0.0
  %55 = vmatpush1.msra.mxu0 0.0
  %56 = vmatprep.subr.mxu0 0.0
  %57 = vmatpush1.msra.mxu0 0.0
  %58 = vmatprep.subr.mxu0 0.0
  %59 = vmatpush1.msra.mxu0 0.0
  %60 = vmatprep.subr.mxu0 0.0
  %61 = vmatpush1.msra.mxu0 0.0
  %62 = vmatprep.subr.mxu0 0.0
  %63 = vmatpush1.msra.mxu0 0.0
  %64 = vmatprep.subr.mxu0 0.0
  %65 = vmatpush1.msra.mxu0 0.0
  %66 = vmatprep.subr.mxu0 0.0
  %67 = vmatpush1.msra.mxu0 0.0
  %68 = vmatprep.subr.mxu0 0.0
  %69 = vmatpush1.msra.mxu0 0.0
  %70 = vmatprep.subr.mxu0 0.0
  %71 = vmatpush1.msra.mxu0 0.0
  %72 = vmatprep.subr.mxu0 0.0
  %73 = vmatpush1.msra.mxu0 0.0
  %74 = vmatprep.subr.mxu0 0.0
  %75 = vmatpush1.msra.mxu0 0.0
  %76 = vmatprep.subr.mxu0 0.0
  %77 = vmatpush1.msra.mxu0 0.0
  %78 = vmatprep.subr.mxu0 0.0
  %79 = vmatpush1.msra.mxu0 0.0
  %80 = vmatprep.subr.mxu0 0.0
  %81 = vmatpush1.msra.mxu0 0.0
  %82 = vmatprep.subr.mxu0 0.0
  %83 = vmatpush1.msra.mxu0 0.0
  %84 = vmatprep.subr.mxu0 0.0
  %85 = vmatpush1.msra.mxu0 0.0
  %86 = vmatprep.subr.mxu0 0.0
  %87 = vmatpush1.msra.mxu0 0.0
  %88 = vmatprep.subr.mxu0 0.0
  %89 = vmatpush1.msra.mxu0 0.0
  %90 = vmatprep.subr.mxu0 0.0
  %91 = vmatpush1.msra.mxu0 0.0
  %92 = vmatprep.subr.mxu0 0.0
  %93 = vmatpush1.msra.mxu0 0.0
  %94 = vmatprep.subr.mxu0 0.0
  %95 = vmatpush1.msra.mxu0 0.0
  %96 = vmatprep.subr.mxu0 0.0
  %97 = vmatpush1.msra.mxu0 0.0
  %98 = vmatprep.subr.mxu0 0.0
  %99 = vmatpush1.msra.mxu0 0.0
  %100 = vmatprep.subr.mxu0 0.0
  %101 = vmatpush1.msra.mxu0 0.0
  %102 = vmatprep.mubr.f32.mxu0 0.0
  %103 = vmatmul.mubr.f32.gmra.mrb[0].mxu0 %v29
  %v104 = vpop.f32.mrb[0].mxu0
  %v105 = vadd.f32 0.0, %v104
  %v106 = vpop.f32.mrb[0].mxu0
  %107 = vmatprep.mubr.f32.mxu0 0.0
  %108 = vmatmul.mubr.f32.gmra.mrb[0].mxu0 %v32
  %v109 = vpop.f32.mrb[0].mxu0
  %v110 = vadd.f32 0.0, %v109
  %v111 = vpop.f32.mrb[0].mxu0
  %112 = vdwg.mxu0
  %s113 = scalar_lea.vmem %s1, 24
  %v114 = vld [vmem:[%s113] sm:$0xff]
  %v115 = vld [vmem:[%s113 + $0x8] sm:$0xff]
  %v116 = vld [vmem:[%s113 + $0x10] sm:$0x1]
  %v118 = vsel %vm34, %v116, 0
  %120 = vmatprep.subr.mxu0 0.0
  %121 = vmatpush1.msra.mxu0 %v114
  %122 = vmatprep.subr.mxu0 0.0
  %123 = vmatpush1.msra.mxu0 %v115
  %124 = vmatprep.subr.mxu0 0.0
  %125 = vmatpush1.msra.mxu0 %v118
  %126 = vmatprep.subr.mxu0 0.0
  %127 = vmatpush1.msra.mxu0 0.0
  %128 = vmatprep.subr.mxu0 0.0
  %129 = vmatpush1.msra.mxu0 0.0
  %130 = vmatprep.subr.mxu0 0.0
  %131 = vmatpush1.msra.mxu0 0.0
  %132 = vmatprep.subr.mxu0 0.0
  %133 = vmatpush1.msra.mxu0 0.0
  %134 = vmatprep.subr.mxu0 0.0
  %135 = vmatpush1.msra.mxu0 0.0
  %136 = vmatprep.subr.mxu0 0.0
  %137 = vmatpush1.msra.mxu0 0.0
  %138 = vmatprep.subr.mxu0 0.0
  %139 = vmatpush1.msra.mxu0 0.0
  %140 = vmatprep.subr.mxu0 0.0
  %141 = vmatpush1.msra.mxu0 0.0
  %142 = vmatprep.subr.mxu0 0.0
  %143 = vmatpush1.msra.mxu0 0.0
  %144 = vmatprep.subr.mxu0 0.0
  %145 = vmatpush1.msra.mxu0 0.0
  %146 = vmatprep.subr.mxu0 0.0
  %147 = vmatpush1.msra.mxu0 0.0
  %148 = vmatprep.subr.mxu0 0.0
  %149 = vmatpush1.msra.mxu0 0.0
  %150 = vmatprep.subr.mxu0 0.0
  %151 = vmatpush1.msra.mxu0 0.0
  %152 = vmatprep.subr.mxu0 0.0
  %153 = vmatpush1.msra.mxu0 0.0
  %154 = vmatprep.subr.mxu0 0.0
  %155 = vmatpush1.msra.mxu0 0.0
  %156 = vmatprep.subr.mxu0 0.0
  %157 = vmatpush1.msra.mxu0 0.0
  %158 = vmatprep.subr.mxu0 0.0
  %159 = vmatpush1.msra.mxu0 0.0
  %160 = vmatprep.subr.mxu0 0.0
  %161 = vmatpush1.msra.mxu0 0.0
  %162 = vmatprep.subr.mxu0 0.0
  %163 = vmatpush1.msra.mxu0 0.0
  %164 = vmatprep.subr.mxu0 0.0
  %165 = vmatpush1.msra.mxu0 0.0
  %166 = vmatprep.subr.mxu0 0.0
  %167 = vmatpush1.msra.mxu0 0.0
  %168 = vmatprep.subr.mxu0 0.0
  %169 = vmatpush1.msra.mxu0 0.0
  %170 = vmatprep.subr.mxu0 0.0
  %171 = vmatpush1.msra.mxu0 0.0
  %172 = vmatprep.subr.mxu0 0.0
  %173 = vmatpush1.msra.mxu0 0.0
  %174 = vmatprep.subr.mxu0 0.0
  %175 = vmatpush1.msra.mxu0 0.0
  %176 = vmatprep.subr.mxu0 0.0
  %177 = vmatpush1.msra.mxu0 0.0
  %178 = vmatprep.subr.mxu0 0.0
  %179 = vmatpush1.msra.mxu0 0.0
  %180 = vmatprep.subr.mxu0 0.0
  %181 = vmatpush1.msra.mxu0 0.0
  %182 = vmatprep.subr.mxu0 0.0
  %183 = vmatpush1.msra.mxu0 0.0
  %184 = vmatprep.mubr.f32.mxu0 0.0
  %185 = vmatmul.mubr.f32.gmra.mrb[0].mxu0 %v29
  %v186 = vpop.f32.mrb[0].mxu0
  %v187 = vadd.f32 0.0, %v186
  %v188 = vpop.f32.mrb[0].mxu0
  %189 = vmatprep.mubr.f32.mxu0 0.0
  %190 = vmatmul.mubr.f32.gmra.mrb[0].mxu0 %v32
  %v191 = vpop.f32.mrb[0].mxu0
  %v192 = vadd.f32 0.0, %v191
  %v193 = vpop.f32.mrb[0].mxu0
  %194 = vdwg.mxu0
  %s195 = scalar_lea.vmem %s1, 48
  %v196 = vld [vmem:[%s195] sm:$0xff]
  %v197 = vld [vmem:[%s195 + $0x8] sm:$0xff]
  %v198 = vld [vmem:[%s195 + $0x10] sm:$0x1]
  %v200 = vsel %vm34, %v198, 0
  %202 = vmatprep.subr.mxu0 0.0
  %203 = vmatpush1.msra.mxu0 %v196
  %204 = vmatprep.subr.mxu0 0.0
  %205 = vmatpush1.msra.mxu0 %v197
  %206 = vmatprep.subr.mxu0 0.0
  %207 = vmatpush1.msra.mxu0 %v200
  %208 = vmatprep.subr.mxu0 0.0
  %209 = vmatpush1.msra.mxu0 0.0
  %210 = vmatprep.subr.mxu0 0.0
  %211 = vmatpush1.msra.mxu0 0.0
  %212 = vmatprep.subr.mxu0 0.0
  %213 = vmatpush1.msra.mxu0 0.0
  %214 = vmatprep.subr.mxu0 0.0
  %215 = vmatpush1.msra.mxu0 0.0
  %216 = vmatprep.subr.mxu0 0.0
  %217 = vmatpush1.msra.mxu0 0.0
  %218 = vmatprep.subr.mxu0 0.0
  %219 = vmatpush1.msra.mxu0 0.0
  %220 = vmatprep.subr.mxu0 0.0
  %221 = vmatpush1.msra.mxu0 0.0
  %222 = vmatprep.subr.mxu0 0.0
  %223 = vmatpush1.msra.mxu0 0.0
  %224 = vmatprep.subr.mxu0 0.0
  %225 = vmatpush1.msra.mxu0 0.0
  %226 = vmatprep.subr.mxu0 0.0
  %227 = vmatpush1.msra.mxu0 0.0
  %228 = vmatprep.subr.mxu0 0.0
  %229 = vmatpush1.msra.mxu0 0.0
  %230 = vmatprep.subr.mxu0 0.0
  %231 = vmatpush1.msra.mxu0 0.0
  %232 = vmatprep.subr.mxu0 0.0
  %233 = vmatpush1.msra.mxu0 0.0
  %234 = vmatprep.subr.mxu0 0.0
  %235 = vmatpush1.msra.mxu0 0.0
  %236 = vmatprep.subr.mxu0 0.0
  %237 = vmatpush1.msra.mxu0 0.0
  %238 = vmatprep.subr.mxu0 0.0
  %239 = vmatpush1.msra.mxu0 0.0
  %240 = vmatprep.subr.mxu0 0.0
  %241 = vmatpush1.msra.mxu0 0.0
  %242 = vmatprep.subr.mxu0 0.0
  %243 = vmatpush1.msra.mxu0 0.0
  %244 = vmatprep.subr.mxu0 0.0
  %245 = vmatpush1.msra.mxu0 0.0
  %246 = vmatprep.subr.mxu0 0.0
  %247 = vmatpush1.msra.mxu0 0.0
  %248 = vmatprep.subr.mxu0 0.0
  %249 = vmatpush1.msra.mxu0 0.0
  %250 = vmatprep.subr.mxu0 0.0
  %251 = vmatpush1.msra.mxu0 0.0
  %252 = vmatprep.subr.mxu0 0.0
  %253 = vmatpush1.msra.mxu0 0.0
  %254 = vmatprep.subr.mxu0 0.0
  %255 = vmatpush1.msra.mxu0 0.0
  %256 = vmatprep.subr.mxu0 0.0
  %257 = vmatpush1.msra.mxu0 0.0
  %258 = vmatprep.subr.mxu0 0.0
  %259 = vmatpush1.msra.mxu0 0.0
  %260 = vmatprep.subr.mxu0 0.0
  %261 = vmatpush1.msra.mxu0 0.0
  %262 = vmatprep.subr.mxu0 0.0
  %263 = vmatpush1.msra.mxu0 0.0
  %264 = vmatprep.subr.mxu0 0.0
  %265 = vmatpush1.msra.mxu0 0.0
  %266 = vmatprep.mubr.f32.mxu0 0.0
  %267 = vmatmul.mubr.f32.gmra.mrb[0].mxu0 %v29
  %v268 = vpop.f32.mrb[0].mxu0
  %v269 = vadd.f32 0.0, %v268
  %v270 = vpop.f32.mrb[0].mxu0
  %271 = vmatprep.mubr.f32.mxu0 0.0
  %272 = vmatmul.mubr.f32.gmra.mrb[0].mxu0 %v32
  %v273 = vpop.f32.mrb[0].mxu0
  %v274 = vadd.f32 0.0, %v273
  %v275 = vpop.f32.mrb[0].mxu0
  %276 = vdwg.mxu0
  %s277 = scalar_lea.vmem %s1, 72
  %v278 = vld [vmem:[%s277] sm:$0xff]
  %v279 = vld [vmem:[%s277 + $0x8] sm:$0xff]
  %v280 = vld [vmem:[%s277 + $0x10] sm:$0x1]
  %v282 = vsel %vm34, %v280, 0
  %284 = vmatprep.subr.mxu0 0.0
  %285 = vmatpush1.msra.mxu0 %v278
  %286 = vmatprep.subr.mxu0 0.0
  %287 = vmatpush1.msra.mxu0 %v279
  %288 = vmatprep.subr.mxu0 0.0
  %289 = vmatpush1.msra.mxu0 %v282
  %290 = vmatprep.subr.mxu0 0.0
  %291 = vmatpush1.msra.mxu0 0.0
  %292 = vmatprep.subr.mxu0 0.0
  %293 = vmatpush1.msra.mxu0 0.0
  %294 = vmatprep.subr.mxu0 0.0
  %295 = vmatpush1.msra.mxu0 0.0
  %296 = vmatprep.subr.mxu0 0.0
  %297 = vmatpush1.msra.mxu0 0.0
  %298 = vmatprep.subr.mxu0 0.0
  %299 = vmatpush1.msra.mxu0 0.0
  %300 = vmatprep.subr.mxu0 0.0
  %301 = vmatpush1.msra.mxu0 0.0
  %302 = vmatprep.subr.mxu0 0.0
  %303 = vmatpush1.msra.mxu0 0.0
  %304 = vmatprep.subr.mxu0 0.0
  %305 = vmatpush1.msra.mxu0 0.0
  %306 = vmatprep.subr.mxu0 0.0
  %307 = vmatpush1.msra.mxu0 0.0
  %308 = vmatprep.subr.mxu0 0.0
  %309 = vmatpush1.msra.mxu0 0.0
  %310 = vmatprep.subr.mxu0 0.0
  %311 = vmatpush1.msra.mxu0 0.0
  %312 = vmatprep.subr.mxu0 0.0
  %313 = vmatpush1.msra.mxu0 0.0
  %314 = vmatprep.subr.mxu0 0.0
  %315 = vmatpush1.msra.mxu0 0.0
  %316 = vmatprep.subr.mxu0 0.0
  %317 = vmatpush1.msra.mxu0 0.0
  %318 = vmatprep.subr.mxu0 0.0
  %319 = vmatpush1.msra.mxu0 0.0
  %320 = vmatprep.subr.mxu0 0.0
  %321 = vmatpush1.msra.mxu0 0.0
  %322 = vmatprep.subr.mxu0 0.0
  %323 = vmatpush1.msra.mxu0 0.0
  %324 = vmatprep.subr.mxu0 0.0
  %325 = vmatpush1.msra.mxu0 0.0
  %326 = vmatprep.subr.mxu0 0.0
  %327 = vmatpush1.msra.mxu0 0.0
  %328 = vmatprep.subr.mxu0 0.0
  %329 = vmatpush1.msra.mxu0 0.0
  %330 = vmatprep.subr.mxu0 0.0
  %331 = vmatpush1.msra.mxu0 0.0
  %332 = vmatprep.subr.mxu0 0.0
  %333 = vmatpush1.msra.mxu0 0.0
  %334 = vmatprep.subr.mxu0 0.0
  %335 = vmatpush1.msra.mxu0 0.0
  %336 = vmatprep.subr.mxu0 0.0
  %337 = vmatpush1.msra.mxu0 0.0
  %338 = vmatprep.subr.mxu0 0.0
  %339 = vmatpush1.msra.mxu0 0.0
  %340 = vmatprep.subr.mxu0 0.0
  %341 = vmatpush1.msra.mxu0 0.0
  %342 = vmatprep.subr.mxu0 0.0
  %343 = vmatpush1.msra.mxu0 0.0
  %344 = vmatprep.subr.mxu0 0.0
  %345 = vmatpush1.msra.mxu0 0.0
  %346 = vmatprep.subr.mxu0 0.0
  %347 = vmatpush1.msra.mxu0 0.0
  %348 = vmatprep.mubr.f32.mxu0 0.0
  %349 = vmatmul.mubr.f32.gmra.mrb[0].mxu0 %v29
  %v350 = vpop.f32.mrb[0].mxu0
  %v351 = vadd.f32 0.0, %v350
  %v352 = vpop.f32.mrb[0].mxu0
  %353 = vmatprep.mubr.f32.mxu0 0.0
  %354 = vmatmul.mubr.f32.gmra.mrb[0].mxu0 %v32
  %v355 = vpop.f32.mrb[0].mxu0
  %v356 = vadd.f32 0.0, %v355
  %v357 = vpop.f32.mrb[0].mxu0
  %358 = vdwg.mxu0
  %s359 = scalar_lea.vmem %s1, 96
  %v360 = vld [vmem:[%s359] sm:$0xff]
  %v361 = vld [vmem:[%s359 + $0x8] sm:$0xff]
  %v362 = vld [vmem:[%s359 + $0x10] sm:$0x1]
  %v364 = vsel %vm34, %v362, 0
  %366 = vmatprep.subr.mxu0 0.0
  %367 = vmatpush1.msra.mxu0 %v360
  %368 = vmatprep.subr.mxu0 0.0
  %369 = vmatpush1.msra.mxu0 %v361
  %370 = vmatprep.subr.mxu0 0.0
  %371 = vmatpush1.msra.mxu0 %v364
  %372 = vmatprep.subr.mxu0 0.0
  %373 = vmatpush1.msra.mxu0 0.0
  %374 = vmatprep.subr.mxu0 0.0
  %375 = vmatpush1.msra.mxu0 0.0
  %376 = vmatprep.subr.mxu0 0.0
  %377 = vmatpush1.msra.mxu0 0.0
  %378 = vmatprep.subr.mxu0 0.0
  %379 = vmatpush1.msra.mxu0 0.0
  %380 = vmatprep.subr.mxu0 0.0
  %381 = vmatpush1.msra.mxu0 0.0
  %382 = vmatprep.subr.mxu0 0.0
  %383 = vmatpush1.msra.mxu0 0.0
  %384 = vmatprep.subr.mxu0 0.0
  %385 = vmatpush1.msra.mxu0 0.0
  %386 = vmatprep.subr.mxu0 0.0
  %387 = vmatpush1.msra.mxu0 0.0
  %388 = vmatprep.subr.mxu0 0.0
  %389 = vmatpush1.msra.mxu0 0.0
  %390 = vmatprep.subr.mxu0 0.0
  %391 = vmatpush1.msra.mxu0 0.0
  %392 = vmatprep.subr.mxu0 0.0
  %393 = vmatpush1.msra.mxu0 0.0
  %394 = vmatprep.subr.mxu0 0.0
  %395 = vmatpush1.msra.mxu0 0.0
  %396 = vmatprep.subr.mxu0 0.0
  %397 = vmatpush1.msra.mxu0 0.0
  %398 = vmatprep.subr.mxu0 0.0
  %399 = vmatpush1.msra.mxu0 0.0
  %400 = vmatprep.subr.mxu0 0.0
  %401 = vmatpush1.msra.mxu0 0.0
  %402 = vmatprep.subr.mxu0 0.0
  %403 = vmatpush1.msra.mxu0 0.0
  %404 = vmatprep.subr.mxu0 0.0
  %405 = vmatpush1.msra.mxu0 0.0
  %406 = vmatprep.subr.mxu0 0.0
  %407 = vmatpush1.msra.mxu0 0.0
  %408 = vmatprep.subr.mxu0 0.0
  %409 = vmatpush1.msra.mxu0 0.0
  %410 = vmatprep.subr.mxu0 0.0
  %411 = vmatpush1.msra.mxu0 0.0
  %412 = vmatprep.subr.mxu0 0.0
  %413 = vmatpush1.msra.mxu0 0.0
  %414 = vmatprep.subr.mxu0 0.0
  %415 = vmatpush1.msra.mxu0 0.0
  %416 = vmatprep.subr.mxu0 0.0
  %417 = vmatpush1.msra.mxu0 0.0
  %418 = vmatprep.subr.mxu0 0.0
  %419 = vmatpush1.msra.mxu0 0.0
  %420 = vmatprep.subr.mxu0 0.0
  %421 = vmatpush1.msra.mxu0 0.0
  %422 = vmatprep.subr.mxu0 0.0
  %423 = vmatpush1.msra.mxu0 0.0
  %424 = vmatprep.subr.mxu0 0.0
  %425 = vmatpush1.msra.mxu0 0.0
  %426 = vmatprep.subr.mxu0 0.0
  %427 = vmatpush1.msra.mxu0 0.0
  %428 = vmatprep.subr.mxu0 0.0
  %429 = vmatpush1.msra.mxu0 0.0
  %430 = vmatprep.mubr.f32.mxu0 0.0
  %431 = vmatmul.mubr.f32.gmra.mrb[0].mxu0 %v29
  %v432 = vpop.f32.mrb[0].mxu0
  %v433 = vadd.f32 0.0, %v432
  %v434 = vpop.f32.mrb[0].mxu0
  %435 = vmatprep.mubr.f32.mxu0 0.0
  %436 = vmatmul.mubr.f32.gmra.mrb[0].mxu0 %v32
  %v437 = vpop.f32.mrb[0].mxu0
  %v438 = vadd.f32 0.0, %v437
  %v439 = vpop.f32.mrb[0].mxu0
  %440 = vdwg.mxu0
  %v441 = vmul.f32 %v105, %v19
  %v442 = vmul.f32 %v110, %v20
  %v443 = vmul.f32 %v351, %v22
  %v444 = vmul.f32 %v356, %v23
  %v445 = vadd.f32 %v441, %v443
  %v446 = vadd.f32 %v442, %v444
  %v447 = vmul.f32 %v187, %v19
  %v448 = vmul.f32 %v192, %v20
  %v449 = vmul.f32 %v433, %v22
  %v450 = vmul.f32 %v438, %v23
  %v451 = vadd.f32 %v447, %v449
  %v452 = vadd.f32 %v448, %v450
  %s453 = scalar_lea.vmem %s1, 120
  %v454 = vld [vmem:[%s453] sm:$0xff]
  %v455 = vld [vmem:[%s453 + $0x8] sm:$0xff]
  %v456 = vld [vmem:[%s453 + $0x10] sm:$0x1]
  %v458 = vsel %vm34, %v456, 0
  %460 = vmatprep.subr.mxu0 0.0
  %461 = vmatpush1.msra.mxu0 %v454
  %462 = vmatprep.subr.mxu0 0.0
  %463 = vmatpush1.msra.mxu0 %v455
  %464 = vmatprep.subr.mxu0 0.0
  %465 = vmatpush1.msra.mxu0 %v458
  %466 = vmatprep.subr.mxu0 0.0
  %467 = vmatpush1.msra.mxu0 0.0
  %468 = vmatprep.subr.mxu0 0.0
  %469 = vmatpush1.msra.mxu0 0.0
  %470 = vmatprep.subr.mxu0 0.0
  %471 = vmatpush1.msra.mxu0 0.0
  %472 = vmatprep.subr.mxu0 0.0
  %473 = vmatpush1.msra.mxu0 0.0
  %474 = vmatprep.subr.mxu0 0.0
  %475 = vmatpush1.msra.mxu0 0.0
  %476 = vmatprep.subr.mxu0 0.0
  %477 = vmatpush1.msra.mxu0 0.0
  %478 = vmatprep.subr.mxu0 0.0
  %479 = vmatpush1.msra.mxu0 0.0
  %480 = vmatprep.subr.mxu0 0.0
  %481 = vmatpush1.msra.mxu0 0.0
  %482 = vmatprep.subr.mxu0 0.0
  %483 = vmatpush1.msra.mxu0 0.0
  %484 = vmatprep.subr.mxu0 0.0
  %485 = vmatpush1.msra.mxu0 0.0
  %486 = vmatprep.subr.mxu0 0.0
  %487 = vmatpush1.msra.mxu0 0.0
  %488 = vmatprep.subr.mxu0 0.0
  %489 = vmatpush1.msra.mxu0 0.0
  %490 = vmatprep.subr.mxu0 0.0
  %491 = vmatpush1.msra.mxu0 0.0
  %492 = vmatprep.subr.mxu0 0.0
  %493 = vmatpush1.msra.mxu0 0.0
  %494 = vmatprep.subr.mxu0 0.0
  %495 = vmatpush1.msra.mxu0 0.0
  %496 = vmatprep.subr.mxu0 0.0
  %497 = vmatpush1.msra.mxu0 0.0
  %498 = vmatprep.subr.mxu0 0.0
  %499 = vmatpush1.msra.mxu0 0.0
  %500 = vmatprep.subr.mxu0 0.0
  %501 = vmatpush1.msra.mxu0 0.0
  %502 = vmatprep.subr.mxu0 0.0
  %503 = vmatpush1.msra.mxu0 0.0
  %504 = vmatprep.subr.mxu0 0.0
  %505 = vmatpush1.msra.mxu0 0.0
  %506 = vmatprep.subr.mxu0 0.0
  %507 = vmatpush1.msra.mxu0 0.0
  %508 = vmatprep.subr.mxu0 0.0
  %509 = vmatpush1.msra.mxu0 0.0
  %510 = vmatprep.subr.mxu0 0.0
  %511 = vmatpush1.msra.mxu0 0.0
  %512 = vmatprep.subr.mxu0 0.0
  %513 = vmatpush1.msra.mxu0 0.0
  %514 = vmatprep.subr.mxu0 0.0
  %515 = vmatpush1.msra.mxu0 0.0
  %516 = vmatprep.subr.mxu0 0.0
  %517 = vmatpush1.msra.mxu0 0.0
  %518 = vmatprep.subr.mxu0 0.0
  %519 = vmatpush1.msra.mxu0 0.0
  %520 = vmatprep.subr.mxu0 0.0
  %521 = vmatpush1.msra.mxu0 0.0
  %522 = vmatprep.subr.mxu0 0.0
  %523 = vmatpush1.msra.mxu0 0.0
  %524 = vmatprep.mubr.f32.mxu0 0.0
  %525 = vmatmul.mubr.f32.gmra.mrb[0].mxu0 %v29
  %v526 = vpop.f32.mrb[0].mxu0
  %v527 = vadd.f32 0.0, %v526
  %v528 = vpop.f32.mrb[0].mxu0
  %529 = vmatprep.mubr.f32.mxu0 0.0
  %530 = vmatmul.mubr.f32.gmra.mrb[0].mxu0 %v32
  %v531 = vpop.f32.mrb[0].mxu0
  %v532 = vadd.f32 0.0, %v531
  %v533 = vpop.f32.mrb[0].mxu0
  %534 = vdwg.mxu0
  %s535 = scalar_lea.vmem %s1, 144
  %v536 = vld [vmem:[%s535] sm:$0xff]
  %v537 = vld [vmem:[%s535 + $0x8] sm:$0xff]
  %v538 = vld [vmem:[%s535 + $0x10] sm:$0x1]
  %v540 = vsel %vm34, %v538, 0
  %542 = vmatprep.subr.mxu0 0.0
  %543 = vmatpush1.msra.mxu0 %v536
  %544 = vmatprep.subr.mxu0 0.0
  %545 = vmatpush1.msra.mxu0 %v537
  %546 = vmatprep.subr.mxu0 0.0
  %547 = vmatpush1.msra.mxu0 %v540
  %548 = vmatprep.subr.mxu0 0.0
  %549 = vmatpush1.msra.mxu0 0.0
  %550 = vmatprep.subr.mxu0 0.0
  %551 = vmatpush1.msra.mxu0 0.0
  %552 = vmatprep.subr.mxu0 0.0
  %553 = vmatpush1.msra.mxu0 0.0
  %554 = vmatprep.subr.mxu0 0.0
  %555 = vmatpush1.msra.mxu0 0.0
  %556 = vmatprep.subr.mxu0 0.0
  %557 = vmatpush1.msra.mxu0 0.0
  %558 = vmatprep.subr.mxu0 0.0
  %559 = vmatpush1.msra.mxu0 0.0
  %560 = vmatprep.subr.mxu0 0.0
  %561 = vmatpush1.msra.mxu0 0.0
  %562 = vmatprep.subr.mxu0 0.0
  %563 = vmatpush1.msra.mxu0 0.0
  %564 = vmatprep.subr.mxu0 0.0
  %565 = vmatpush1.msra.mxu0 0.0
  %566 = vmatprep.subr.mxu0 0.0
  %567 = vmatpush1.msra.mxu0 0.0
  %568 = vmatprep.subr.mxu0 0.0
  %569 = vmatpush1.msra.mxu0 0.0
  %570 = vmatprep.subr.mxu0 0.0
  %571 = vmatpush1.msra.mxu0 0.0
  %572 = vmatprep.subr.mxu0 0.0
  %573 = vmatpush1.msra.mxu0 0.0
  %574 = vmatprep.subr.mxu0 0.0
  %575 = vmatpush1.msra.mxu0 0.0
  %576 = vmatprep.subr.mxu0 0.0
  %577 = vmatpush1.msra.mxu0 0.0
  %578 = vmatprep.subr.mxu0 0.0
  %579 = vmatpush1.msra.mxu0 0.0
  %580 = vmatprep.subr.mxu0 0.0
  %581 = vmatpush1.msra.mxu0 0.0
  %582 = vmatprep.subr.mxu0 0.0
  %583 = vmatpush1.msra.mxu0 0.0
  %584 = vmatprep.subr.mxu0 0.0
  %585 = vmatpush1.msra.mxu0 0.0
  %586 = vmatprep.subr.mxu0 0.0
  %587 = vmatpush1.msra.mxu0 0.0
  %588 = vmatprep.subr.mxu0 0.0
  %589 = vmatpush1.msra.mxu0 0.0
  %590 = vmatprep.subr.mxu0 0.0
  %591 = vmatpush1.msra.mxu0 0.0
  %592 = vmatprep.subr.mxu0 0.0
  %593 = vmatpush1.msra.mxu0 0.0
  %594 = vmatprep.subr.mxu0 0.0
  %595 = vmatpush1.msra.mxu0 0.0
  %596 = vmatprep.subr.mxu0 0.0
  %597 = vmatpush1.msra.mxu0 0.0
  %598 = vmatprep.subr.mxu0 0.0
  %599 = vmatpush1.msra.mxu0 0.0
  %600 = vmatprep.subr.mxu0 0.0
  %601 = vmatpush1.msra.mxu0 0.0
  %602 = vmatprep.subr.mxu0 0.0
  %603 = vmatpush1.msra.mxu0 0.0
  %604 = vmatprep.subr.mxu0 0.0
  %605 = vmatpush1.msra.mxu0 0.0
  %606 = vmatprep.mubr.f32.mxu0 0.0
  %607 = vmatmul.mubr.f32.gmra.mrb[0].mxu0 %v29
  %v608 = vpop.f32.mrb[0].mxu0
  %v609 = vadd.f32 0.0, %v608
  %v610 = vpop.f32.mrb[0].mxu0
  %611 = vmatprep.mubr.f32.mxu0 0.0
  %612 = vmatmul.mubr.f32.gmra.mrb[0].mxu0 %v32
  %v613 = vpop.f32.mrb[0].mxu0
  %v614 = vadd.f32 0.0, %v613
  %v615 = vpop.f32.mrb[0].mxu0
  %616 = vdwg.mxu0
  %s617 = scalar_lea.vmem %s1, 168
  %v618 = vld [vmem:[%s617] sm:$0xff]
  %v619 = vld [vmem:[%s617 + $0x8] sm:$0xff]
  %v620 = vld [vmem:[%s617 + $0x10] sm:$0x1]
  %v622 = vsel %vm34, %v620, 0
  %624 = vmatprep.subr.mxu0 0.0
  %625 = vmatpush1.msra.mxu0 %v618
  %626 = vmatprep.subr.mxu0 0.0
  %627 = vmatpush1.msra.mxu0 %v619
  %628 = vmatprep.subr.mxu0 0.0
  %629 = vmatpush1.msra.mxu0 %v622
  %630 = vmatprep.subr.mxu0 0.0
  %631 = vmatpush1.msra.mxu0 0.0
  %632 = vmatprep.subr.mxu0 0.0
  %633 = vmatpush1.msra.mxu0 0.0
  %634 = vmatprep.subr.mxu0 0.0
  %635 = vmatpush1.msra.mxu0 0.0
  %636 = vmatprep.subr.mxu0 0.0
  %637 = vmatpush1.msra.mxu0 0.0
  %638 = vmatprep.subr.mxu0 0.0
  %639 = vmatpush1.msra.mxu0 0.0
  %640 = vmatprep.subr.mxu0 0.0
  %641 = vmatpush1.msra.mxu0 0.0
  %642 = vmatprep.subr.mxu0 0.0
  %643 = vmatpush1.msra.mxu0 0.0
  %644 = vmatprep.subr.mxu0 0.0
  %645 = vmatpush1.msra.mxu0 0.0
  %646 = vmatprep.subr.mxu0 0.0
  %647 = vmatpush1.msra.mxu0 0.0
  %648 = vmatprep.subr.mxu0 0.0
  %649 = vmatpush1.msra.mxu0 0.0
  %650 = vmatprep.subr.mxu0 0.0
  %651 = vmatpush1.msra.mxu0 0.0
  %652 = vmatprep.subr.mxu0 0.0
  %653 = vmatpush1.msra.mxu0 0.0
  %654 = vmatprep.subr.mxu0 0.0
  %655 = vmatpush1.msra.mxu0 0.0
  %656 = vmatprep.subr.mxu0 0.0
  %657 = vmatpush1.msra.mxu0 0.0
  %658 = vmatprep.subr.mxu0 0.0
  %659 = vmatpush1.msra.mxu0 0.0
  %660 = vmatprep.subr.mxu0 0.0
  %661 = vmatpush1.msra.mxu0 0.0
  %662 = vmatprep.subr.mxu0 0.0
  %663 = vmatpush1.msra.mxu0 0.0
  %664 = vmatprep.subr.mxu0 0.0
  %665 = vmatpush1.msra.mxu0 0.0
  %666 = vmatprep.subr.mxu0 0.0
  %667 = vmatpush1.msra.mxu0 0.0
  %668 = vmatprep.subr.mxu0 0.0
  %669 = vmatpush1.msra.mxu0 0.0
  %670 = vmatprep.subr.mxu0 0.0
  %671 = vmatpush1.msra.mxu0 0.0
  %672 = vmatprep.subr.mxu0 0.0
  %673 = vmatpush1.msra.mxu0 0.0
  %674 = vmatprep.subr.mxu0 0.0
  %675 = vmatpush1.msra.mxu0 0.0
  %676 = vmatprep.subr.mxu0 0.0
  %677 = vmatpush1.msra.mxu0 0.0
  %678 = vmatprep.subr.mxu0 0.0
  %679 = vmatpush1.msra.mxu0 0.0
  %680 = vmatprep.subr.mxu0 0.0
  %681 = vmatpush1.msra.mxu0 0.0
  %682 = vmatprep.subr.mxu0 0.0
  %683 = vmatpush1.msra.mxu0 0.0
  %684 = vmatprep.subr.mxu0 0.0
  %685 = vmatpush1.msra.mxu0 0.0
  %686 = vmatprep.subr.mxu0 0.0
  %687 = vmatpush1.msra.mxu0 0.0
  %688 = vmatprep.mubr.f32.mxu0 0.0
  %689 = vmatmul.mubr.f32.gmra.mrb[0].mxu0 %v29
  %v690 = vpop.f32.mrb[0].mxu0
  %v691 = vadd.f32 0.0, %v690
  %v692 = vpop.f32.mrb[0].mxu0
  %693 = vmatprep.mubr.f32.mxu0 0.0
  %694 = vmatmul.mubr.f32.gmra.mrb[0].mxu0 %v32
  %v695 = vpop.f32.mrb[0].mxu0
  %v696 = vadd.f32 0.0, %v695
  %v697 = vpop.f32.mrb[0].mxu0
  %698 = vdwg.mxu0
  %s699 = scalar_lea.vmem %s1, 192
  %v700 = vld [vmem:[%s699] sm:$0xff]
  %v701 = vld [vmem:[%s699 + $0x8] sm:$0xff]
  %v702 = vld [vmem:[%s699 + $0x10] sm:$0x1]
  %v704 = vsel %vm34, %v702, 0
  %706 = vmatprep.subr.mxu0 0.0
  %707 = vmatpush1.msra.mxu0 %v700
  %708 = vmatprep.subr.mxu0 0.0
  %709 = vmatpush1.msra.mxu0 %v701
  %710 = vmatprep.subr.mxu0 0.0
  %711 = vmatpush1.msra.mxu0 %v704
  %712 = vmatprep.subr.mxu0 0.0
  %713 = vmatpush1.msra.mxu0 0.0
  %714 = vmatprep.subr.mxu0 0.0
  %715 = vmatpush1.msra.mxu0 0.0
  %716 = vmatprep.subr.mxu0 0.0
  %717 = vmatpush1.msra.mxu0 0.0
  %718 = vmatprep.subr.mxu0 0.0
  %719 = vmatpush1.msra.mxu0 0.0
  %720 = vmatprep.subr.mxu0 0.0
  %721 = vmatpush1.msra.mxu0 0.0
  %722 = vmatprep.subr.mxu0 0.0
  %723 = vmatpush1.msra.mxu0 0.0
  %724 = vmatprep.subr.mxu0 0.0
  %725 = vmatpush1.msra.mxu0 0.0
  %726 = vmatprep.subr.mxu0 0.0
  %727 = vmatpush1.msra.mxu0 0.0
  %728 = vmatprep.subr.mxu0 0.0
  %729 = vmatpush1.msra.mxu0 0.0
  %730 = vmatprep.subr.mxu0 0.0
  %731 = vmatpush1.msra.mxu0 0.0
  %732 = vmatprep.subr.mxu0 0.0
  %733 = vmatpush1.msra.mxu0 0.0
  %734 = vmatprep.subr.mxu0 0.0
  %735 = vmatpush1.msra.mxu0 0.0
  %736 = vmatprep.subr.mxu0 0.0
  %737 = vmatpush1.msra.mxu0 0.0
  %738 = vmatprep.subr.mxu0 0.0
  %739 = vmatpush1.msra.mxu0 0.0
  %740 = vmatprep.subr.mxu0 0.0
  %741 = vmatpush1.msra.mxu0 0.0
  %742 = vmatprep.subr.mxu0 0.0
  %743 = vmatpush1.msra.mxu0 0.0
  %744 = vmatprep.subr.mxu0 0.0
  %745 = vmatpush1.msra.mxu0 0.0
  %746 = vmatprep.subr.mxu0 0.0
  %747 = vmatpush1.msra.mxu0 0.0
  %748 = vmatprep.subr.mxu0 0.0
  %749 = vmatpush1.msra.mxu0 0.0
  %750 = vmatprep.subr.mxu0 0.0
  %751 = vmatpush1.msra.mxu0 0.0
  %752 = vmatprep.subr.mxu0 0.0
  %753 = vmatpush1.msra.mxu0 0.0
  %754 = vmatprep.subr.mxu0 0.0
  %755 = vmatpush1.msra.mxu0 0.0
  %756 = vmatprep.subr.mxu0 0.0
  %757 = vmatpush1.msra.mxu0 0.0
  %758 = vmatprep.subr.mxu0 0.0
  %759 = vmatpush1.msra.mxu0 0.0
  %760 = vmatprep.subr.mxu0 0.0
  %761 = vmatpush1.msra.mxu0 0.0
  %762 = vmatprep.subr.mxu0 0.0
  %763 = vmatpush1.msra.mxu0 0.0
  %764 = vmatprep.subr.mxu0 0.0
  %765 = vmatpush1.msra.mxu0 0.0
  %766 = vmatprep.subr.mxu0 0.0
  %767 = vmatpush1.msra.mxu0 0.0
  %768 = vmatprep.subr.mxu0 0.0
  %769 = vmatpush1.msra.mxu0 0.0
  %770 = vmatprep.mubr.f32.mxu0 0.0
  %771 = vmatmul.mubr.f32.gmra.mrb[0].mxu0 %v29
  %v772 = vpop.f32.mrb[0].mxu0
  %v773 = vadd.f32 0.0, %v772
  %v774 = vpop.f32.mrb[0].mxu0
  %775 = vmatprep.mubr.f32.mxu0 0.0
  %776 = vmatmul.mubr.f32.gmra.mrb[0].mxu0 %v32
  %v777 = vpop.f32.mrb[0].mxu0
  %v778 = vadd.f32 0.0, %v777
  %v779 = vpop.f32.mrb[0].mxu0
  %780 = vdwg.mxu0
  %s781 = scalar_lea.vmem %s1, 216
  %v782 = vld [vmem:[%s781] sm:$0xff]
  %v783 = vld [vmem:[%s781 + $0x8] sm:$0xff]
  %v784 = vld [vmem:[%s781 + $0x10] sm:$0x1]
  %v786 = vsel %vm34, %v784, 0
  %788 = vmatprep.subr.mxu0 0.0
  %789 = vmatpush1.msra.mxu0 %v782
  %790 = vmatprep.subr.mxu0 0.0
  %791 = vmatpush1.msra.mxu0 %v783
  %792 = vmatprep.subr.mxu0 0.0
  %793 = vmatpush1.msra.mxu0 %v786
  %794 = vmatprep.subr.mxu0 0.0
  %795 = vmatpush1.msra.mxu0 0.0
  %796 = vmatprep.subr.mxu0 0.0
  %797 = vmatpush1.msra.mxu0 0.0
  %798 = vmatprep.subr.mxu0 0.0
  %799 = vmatpush1.msra.mxu0 0.0
  %800 = vmatprep.subr.mxu0 0.0
  %801 = vmatpush1.msra.mxu0 0.0
  %802 = vmatprep.subr.mxu0 0.0
  %803 = vmatpush1.msra.mxu0 0.0
  %804 = vmatprep.subr.mxu0 0.0
  %805 = vmatpush1.msra.mxu0 0.0
  %806 = vmatprep.subr.mxu0 0.0
  %807 = vmatpush1.msra.mxu0 0.0
  %808 = vmatprep.subr.mxu0 0.0
  %809 = vmatpush1.msra.mxu0 0.0
  %810 = vmatprep.subr.mxu0 0.0
  %811 = vmatpush1.msra.mxu0 0.0
  %812 = vmatprep.subr.mxu0 0.0
  %813 = vmatpush1.msra.mxu0 0.0
  %814 = vmatprep.subr.mxu0 0.0
  %815 = vmatpush1.msra.mxu0 0.0
  %816 = vmatprep.subr.mxu0 0.0
  %817 = vmatpush1.msra.mxu0 0.0
  %818 = vmatprep.subr.mxu0 0.0
  %819 = vmatpush1.msra.mxu0 0.0
  %820 = vmatprep.subr.mxu0 0.0
  %821 = vmatpush1.msra.mxu0 0.0
  %822 = vmatprep.subr.mxu0 0.0
  %823 = vmatpush1.msra.mxu0 0.0
  %824 = vmatprep.subr.mxu0 0.0
  %825 = vmatpush1.msra.mxu0 0.0
  %826 = vmatprep.subr.mxu0 0.0
  %827 = vmatpush1.msra.mxu0 0.0
  %828 = vmatprep.subr.mxu0 0.0
  %829 = vmatpush1.msra.mxu0 0.0
  %830 = vmatprep.subr.mxu0 0.0
  %831 = vmatpush1.msra.mxu0 0.0
  %832 = vmatprep.subr.mxu0 0.0
  %833 = vmatpush1.msra.mxu0 0.0
  %834 = vmatprep.subr.mxu0 0.0
  %835 = vmatpush1.msra.mxu0 0.0
  %836 = vmatprep.subr.mxu0 0.0
  %837 = vmatpush1.msra.mxu0 0.0
  %838 = vmatprep.subr.mxu0 0.0
  %839 = vmatpush1.msra.mxu0 0.0
  %840 = vmatprep.subr.mxu0 0.0
  %841 = vmatpush1.msra.mxu0 0.0
  %842 = vmatprep.subr.mxu0 0.0
  %843 = vmatpush1.msra.mxu0 0.0
  %844 = vmatprep.subr.mxu0 0.0
  %845 = vmatpush1.msra.mxu0 0.0
  %846 = vmatprep.subr.mxu0 0.0
  %847 = vmatpush1.msra.mxu0 0.0
  %848 = vmatprep.subr.mxu0 0.0
  %849 = vmatpush1.msra.mxu0 0.0
  %850 = vmatprep.subr.mxu0 0.0
  %851 = vmatpush1.msra.mxu0 0.0
  %852 = vmatprep.mubr.f32.mxu0 0.0
  %853 = vmatmul.mubr.f32.gmra.mrb[0].mxu0 %v29
  %v854 = vpop.f32.mrb[0].mxu0
  %v855 = vadd.f32 0.0, %v854
  %v856 = vpop.f32.mrb[0].mxu0
  %857 = vmatprep.mubr.f32.mxu0 0.0
  %858 = vmatmul.mubr.f32.gmra.mrb[0].mxu0 %v32
  %v859 = vpop.f32.mrb[0].mxu0
  %v860 = vadd.f32 0.0, %v859
  %v861 = vpop.f32.mrb[0].mxu0
  %862 = vdwg.mxu0
  %v863 = vmul.f32 %v527, %v19
  %v864 = vmul.f32 %v532, %v20
  %v865 = vmul.f32 %v773, %v22
  %v866 = vmul.f32 %v778, %v23
  %v867 = vadd.f32 %v863, %v865
  %v868 = vadd.f32 %v864, %v866
  %v869 = vmul.f32 %v609, %v19
  %v870 = vmul.f32 %v614, %v20
  %v871 = vmul.f32 %v855, %v22
  %v872 = vmul.f32 %v860, %v23
  %v873 = vadd.f32 %v869, %v871
  %v874 = vadd.f32 %v870, %v872
  %vm875 = vcmask 64512
  %v877 = vsel %vm875, %v445, 0
  %v880 = vsel %vm875, %v446, 0
  %v883 = vsel %vm875, %v867, 0
  %v886 = vsel %vm875, %v868, 0
  %v889 = vsel %vm875, %v451, 0
  %v892 = vsel %vm875, %v452, 0
  %v895 = vsel %vm875, %v873, 0
  %v898 = vsel %vm875, %v874, 0
  %900 = vmatprep.subr.mxu0 0.0
  %901 = vmatpush1.xpose.msra.mxu0 %v889
  %902 = vmatprep.subr.mxu0 0.0
  %903 = vmatpush1.xpose.msra.mxu0 %v892
  %904 = vmatprep.subr.mxu0 0.0
  %905 = vmatpush1.xpose.msra.mxu0 %v895
  %906 = vmatprep.subr.mxu0 0.0
  %907 = vmatpush1.xpose.msra.mxu0 %v898
  %908 = vmatprep.subr.mxu0 0.0
  %909 = vmatpush1.xpose.msra.mxu0 0.0
  %910 = vmatprep.subr.mxu0 0.0
  %911 = vmatpush1.xpose.msra.mxu0 0.0
  %912 = vmatprep.subr.mxu0 0.0
  %913 = vmatpush1.xpose.msra.mxu0 0.0
  %914 = vmatprep.subr.mxu0 0.0
  %915 = vmatpush1.xpose.msra.mxu0 0.0
  %916 = vmatprep.subr.mxu0 0.0
  %917 = vmatpush1.xpose.msra.mxu0 0.0
  %918 = vmatprep.subr.mxu0 0.0
  %919 = vmatpush1.xpose.msra.mxu0 0.0
  %920 = vmatprep.subr.mxu0 0.0
  %921 = vmatpush1.xpose.msra.mxu0 0.0
  %922 = vmatprep.subr.mxu0 0.0
  %923 = vmatpush1.xpose.msra.mxu0 0.0
  %924 = vmatprep.subr.mxu0 0.0
  %925 = vmatpush1.xpose.msra.mxu0 0.0
  %926 = vmatprep.subr.mxu0 0.0
  %927 = vmatpush1.xpose.msra.mxu0 0.0
  %928 = vmatprep.subr.mxu0 0.0
  %929 = vmatpush1.xpose.msra.mxu0 0.0
  %930 = vmatprep.subr.mxu0 0.0
  %931 = vmatpush1.xpose.msra.mxu0 0.0
  %932 = vmatprep.subr.mxu0 0.0
  %933 = vmatpush1.xpose.msra.mxu0 0.0
  %934 = vmatprep.subr.mxu0 0.0
  %935 = vmatpush1.xpose.msra.mxu0 0.0
  %936 = vmatprep.subr.mxu0 0.0
  %937 = vmatpush1.xpose.msra.mxu0 0.0
  %938 = vmatprep.subr.mxu0 0.0
  %939 = vmatpush1.xpose.msra.mxu0 0.0
  %940 = vmatprep.subr.mxu0 0.0
  %941 = vmatpush1.xpose.msra.mxu0 0.0
  %942 = vmatprep.subr.mxu0 0.0
  %943 = vmatpush1.xpose.msra.mxu0 0.0
  %944 = vmatprep.subr.mxu0 0.0
  %945 = vmatpush1.xpose.msra.mxu0 0.0
  %946 = vmatprep.subr.mxu0 0.0
  %947 = vmatpush1.xpose.msra.mxu0 0.0
  %948 = vmatprep.subr.mxu0 0.0
  %949 = vmatpush1.xpose.msra.mxu0 0.0
  %950 = vmatprep.subr.mxu0 0.0
  %951 = vmatpush1.xpose.msra.mxu0 0.0
  %952 = vmatprep.subr.mxu0 0.0
  %953 = vmatpush1.xpose.msra.mxu0 0.0
  %954 = vmatprep.subr.mxu0 0.0
  %955 = vmatpush1.xpose.msra.mxu0 0.0
  %956 = vmatprep.subr.mxu0 0.0
  %957 = vmatpush1.xpose.msra.mxu0 0.0
  %958 = vmatprep.subr.mxu0 0.0
  %959 = vmatpush1.xpose.msra.mxu0 0.0
  %960 = vmatprep.subr.mxu0 0.0
  %961 = vmatpush1.xpose.msra.mxu0 0.0
  %962 = vmatprep.subr.mxu0 0.0
  %963 = vmatpush1.xpose.msra.mxu0 0.0
  %964 = vmatprep.mubr.f32.mxu0 0.0
  %965 = vmatmul.mubr.f32.gmra.mrb[0].mxu0 %v877
  %v966 = vpop.f32.mrb[0].mxu0
  %v967 = vadd.f32 0.0, %v966
  %v968 = vpop.f32.mrb[0].mxu0
  %969 = vmatprep.mubr.f32.mxu0 0.0
  %970 = vmatmul.mubr.f32.gmra.mrb[0].mxu0 %v880
  %v971 = vpop.f32.mrb[0].mxu0
  %v972 = vadd.f32 0.0, %v971
  %v973 = vpop.f32.mrb[0].mxu0
  %974 = vmatprep.mubr.f32.mxu0 0.0
  %975 = vmatmul.mubr.f32.gmra.mrb[0].mxu0 %v883
  %v976 = vpop.f32.mrb[0].mxu0
  %v977 = vadd.f32 0.0, %v976
  %v978 = vpop.f32.mrb[0].mxu0
  %979 = vmatprep.mubr.f32.mxu0 0.0
  %980 = vmatmul.mubr.f32.gmra.mrb[0].mxu0 %v886
  %v981 = vpop.f32.mrb[0].mxu0
  %v982 = vadd.f32 0.0, %v981
  %v983 = vpop.f32.mrb[0].mxu0
  %984 = vdwg.mxu0
  %v985 = vlaneseq
  %v986 = vshrl.u32 %v985, 7
  %v987 = vadd.s32 %v986, 8
  %v988 = vadd.s32 %v986, 16
  %v989 = vadd.s32 %v986, 24
  %v990 = vlaneseq
  %v991 = vand.u32 %v990, 127
  %vm992 = vcmp.ge.s32.totalorder %v986, 5
  %vm993 = vcmp.ge.s32.totalorder %v987, 5
  %vm994 = vcmp.ge.s32.totalorder %v988, 5
  %vm995 = vcmp.ge.s32.totalorder %v989, 5
  %v996 = vsel %vm992, 1, 0
  %v997 = vsel %vm993, 1, 0
  %v998 = vsel %vm994, 1, 0
  %v999 = vsel %vm995, 1, 0
  %vm1000 = vcmp.ge.s32.totalorder %v991, 5
  %v1001 = vsel %vm1000, 1, 0
  %vm1002 = vcmp.ge.s32.totalorder %v986, 10
  %vm1003 = vcmp.ge.s32.totalorder %v987, 10
  %vm1004 = vcmp.ge.s32.totalorder %v988, 10
  %vm1005 = vcmp.ge.s32.totalorder %v989, 10
  %v1006 = vsel %vm1002, 1, 0
  %v1007 = vsel %vm1003, 1, 0
  %v1008 = vsel %vm1004, 1, 0
  %v1009 = vsel %vm1005, 1, 0
  %v1010 = vadd.s32 %v996, %v1006
  %v1011 = vadd.s32 %v997, %v1007
  %v1012 = vadd.s32 %v998, %v1008
  %v1013 = vadd.s32 %v999, %v1009
  %vm1014 = vcmp.ge.s32.totalorder %v991, 10
  %v1015 = vsel %vm1014, 1, 0
  %v1016 = vadd.s32 %v1001, %v1015
  %vm1017 = vcmp.ge.s32.totalorder %v986, 15
  %vm1018 = vcmp.ge.s32.totalorder %v987, 15
  %vm1019 = vcmp.ge.s32.totalorder %v988, 15
  %vm1020 = vcmp.ge.s32.totalorder %v989, 15
  %v1021 = vsel %vm1017, 1, 0
  %v1022 = vsel %vm1018, 1, 0
  %v1023 = vsel %vm1019, 1, 0
  %v1024 = vsel %vm1020, 1, 0
  %v1025 = vadd.s32 %v1010, %v1021
  %v1026 = vadd.s32 %v1011, %v1022
  %v1027 = vadd.s32 %v1012, %v1023
  %v1028 = vadd.s32 %v1013, %v1024
  %vm1029 = vcmp.ge.s32.totalorder %v991, 15
  %v1030 = vsel %vm1029, 1, 0
  %v1031 = vadd.s32 %v1016, %v1030
  %vm1032 = vcmp.ge.s32.totalorder %v986, 16
  %vm1033 = vcmp.ge.s32.totalorder %v987, 16
  %vm1034 = vcmp.ge.s32.totalorder %v988, 16
  %vm1035 = vcmp.ge.s32.totalorder %v989, 16
  %v1036 = vsel %vm1032, 1, 0
  %v1037 = vsel %vm1033, 1, 0
  %v1038 = vsel %vm1034, 1, 0
  %v1039 = vsel %vm1035, 1, 0
  %v1040 = vadd.s32 %v1025, %v1036
  %v1041 = vadd.s32 %v1026, %v1037
  %v1042 = vadd.s32 %v1027, %v1038
  %v1043 = vadd.s32 %v1028, %v1039
  %vm1044 = vcmp.ge.s32.totalorder %v991, 16
  %v1045 = vsel %vm1044, 1, 0
  %v1046 = vadd.s32 %v1031, %v1045
  %vm1047 = vcmp.ge.s32.totalorder %v986, 21
  %vm1048 = vcmp.ge.s32.totalorder %v987, 21
  %vm1049 = vcmp.ge.s32.totalorder %v988, 21
  %vm1050 = vcmp.ge.s32.totalorder %v989, 21
  %v1051 = vsel %vm1047, 1, 0
  %v1052 = vsel %vm1048, 1, 0
  %v1053 = vsel %vm1049, 1, 0
  %v1054 = vsel %vm1050, 1, 0
  %v1055 = vadd.s32 %v1040, %v1051
  %v1056 = vadd.s32 %v1041, %v1052
  %v1057 = vadd.s32 %v1042, %v1053
  %v1058 = vadd.s32 %v1043, %v1054
  %vm1059 = vcmp.ge.s32.totalorder %v991, 21
  %v1060 = vsel %vm1059, 1, 0
  %v1061 = vadd.s32 %v1046, %v1060
  %vm1062 = vcmp.ge.s32.totalorder %v986, 26
  %vm1063 = vcmp.ge.s32.totalorder %v987, 26
  %vm1064 = vcmp.ge.s32.totalorder %v988, 26
  %vm1065 = vcmp.ge.s32.totalorder %v989, 26
  %v1066 = vsel %vm1062, 1, 0
  %v1067 = vsel %vm1063, 1, 0
  %v1068 = vsel %vm1064, 1, 0
  %v1069 = vsel %vm1065, 1, 0
  %v1070 = vadd.s32 %v1055, %v1066
  %v1071 = vadd.s32 %v1056, %v1067
  %v1072 = vadd.s32 %v1057, %v1068
  %v1073 = vadd.s32 %v1058, %v1069
  %vm1074 = vcmp.ge.s32.totalorder %v991, 26
  %v1075 = vsel %vm1074, 1, 0
  %v1076 = vadd.s32 %v1061, %v1075
  %vm1077 = vcmp.ge.s32.totalorder %v986, 31
  %vm1078 = vcmp.ge.s32.totalorder %v987, 31
  %vm1079 = vcmp.ge.s32.totalorder %v988, 31
  %vm1080 = vcmp.ge.s32.totalorder %v989, 31
  %v1081 = vsel %vm1077, 1, 0
  %v1082 = vsel %vm1078, 1, 0
  %v1083 = vsel %vm1079, 1, 0
  %v1084 = vsel %vm1080, 1, 0
  %v1085 = vadd.s32 %v1070, %v1081
  %v1086 = vadd.s32 %v1071, %v1082
  %v1087 = vadd.s32 %v1072, %v1083
  %v1088 = vadd.s32 %v1073, %v1084
  %vm1089 = vcmp.ge.s32.totalorder %v991, 31
  %v1090 = vsel %vm1089, 1, 0
  %v1091 = vadd.s32 %v1076, %v1090
  %vm1092 = vcmp.eq.s32.totalorder %v1085, %v1091
  %vm1093 = vcmp.eq.s32.totalorder %v1086, %v1091
  %vm1094 = vcmp.eq.s32.totalorder %v1087, %v1091
  %vm1095 = vcmp.eq.s32.totalorder %v1088, %v1091
  %v1096 = vsel %vm1092, %v967, -1e+30
  %v1097 = vsel %vm1093, %v972, -1e+30
  %v1098 = vsel %vm1094, %v977, -1e+30
  %v1099 = vsel %vm1095, %v982, -1e+30
  %vm1100 = vcmask 261120
  %v1101 = vsel %vm1100, %v1096, -inf
  %1102 = vmax.xlane.f32.xlu0 %v1101
  %v1103 = vpop.xlane.xlu0 %1102
  %v1104 = vsel %vm1100, %v1097, -inf
  %1105 = vmax.xlane.f32.xlu0 %v1104
  %v1106 = vpop.xlane.xlu0 %1105
  %v1107 = vsel %vm1100, %v1098, -inf
  %1108 = vmax.xlane.f32.xlu0 %v1107
  %v1109 = vpop.xlane.xlu0 %1108
  %v1110 = vsel %vm1100, %v1099, -inf
  %1111 = vmax.xlane.f32.xlu0 %v1110
  %v1112 = vpop.xlane.xlu0 %1111
  %v1113 = vsub.f32 %v1096, %v1103
  %v1114 = vsub.f32 %v1097, %v1106
  %v1115 = vsub.f32 %v1098, %v1109
  %v1116 = vsub.f32 %v1099, %v1112
  %v1117 = vmul.f32 %v1113, 1.442695
  %v1118 = vpow.pop %v1117
  %v1119 = vmul.f32 %v1114, 1.442695
  %v1120 = vpow.pop %v1119
  %v1121 = vmul.f32 %v1115, 1.442695
  %v1122 = vpow.pop %v1121
  %v1123 = vmul.f32 %v1116, 1.442695
  %v1124 = vpow.pop %v1123
  %v1125 = vsel %vm1100, %v1118, 0.0
  %1126 = vadd.xlane.f32.xlu0 %v1125
  %v1127 = vpop.xlane.xlu0 %1126
  %v1128 = vsel %vm1100, %v1120, 0.0
  %1129 = vadd.xlane.f32.xlu0 %v1128
  %v1130 = vpop.xlane.xlu0 %1129
  %v1131 = vsel %vm1100, %v1122, 0.0
  %1132 = vadd.xlane.f32.xlu0 %v1131
  %v1133 = vpop.xlane.xlu0 %1132
  %v1134 = vsel %vm1100, %v1124, 0.0
  %1135 = vadd.xlane.f32.xlu0 %v1134
  %v1136 = vpop.xlane.xlu0 %1135
  %v1138 = vsel %vm1100, %v1118, 0
  %v1141 = vsel %vm1100, %v1120, 0
  %v1144 = vsel %vm1100, %v1122, 0
  %v1147 = vsel %vm1100, %v1124, 0
  %1149 = vmatprep.subr.mxu0 0.0
  %1150 = vmatpush1.msra.mxu0 %v269
  %1151 = vmatprep.subr.mxu0 0.0
  %1152 = vmatpush1.msra.mxu0 %v274
  %1153 = vmatprep.subr.mxu0 0.0
  %1154 = vmatpush1.msra.mxu0 %v691
  %1155 = vmatprep.subr.mxu0 0.0
  %1156 = vmatpush1.msra.mxu0 %v696
  %1157 = vmatprep.subr.mxu0 0.0
  %1158 = vmatpush1.msra.mxu0 0.0
  %1159 = vmatprep.subr.mxu0 0.0
  %1160 = vmatpush1.msra.mxu0 0.0
  %1161 = vmatprep.subr.mxu0 0.0
  %1162 = vmatpush1.msra.mxu0 0.0
  %1163 = vmatprep.subr.mxu0 0.0
  %1164 = vmatpush1.msra.mxu0 0.0
  %1165 = vmatprep.subr.mxu0 0.0
  %1166 = vmatpush1.msra.mxu0 0.0
  %1167 = vmatprep.subr.mxu0 0.0
  %1168 = vmatpush1.msra.mxu0 0.0
  %1169 = vmatprep.subr.mxu0 0.0
  %1170 = vmatpush1.msra.mxu0 0.0
  %1171 = vmatprep.subr.mxu0 0.0
  %1172 = vmatpush1.msra.mxu0 0.0
  %1173 = vmatprep.subr.mxu0 0.0
  %1174 = vmatpush1.msra.mxu0 0.0
  %1175 = vmatprep.subr.mxu0 0.0
  %1176 = vmatpush1.msra.mxu0 0.0
  %1177 = vmatprep.subr.mxu0 0.0
  %1178 = vmatpush1.msra.mxu0 0.0
  %1179 = vmatprep.subr.mxu0 0.0
  %1180 = vmatpush1.msra.mxu0 0.0
  %1181 = vmatprep.subr.mxu0 0.0
  %1182 = vmatpush1.msra.mxu0 0.0
  %1183 = vmatprep.subr.mxu0 0.0
  %1184 = vmatpush1.msra.mxu0 0.0
  %1185 = vmatprep.subr.mxu0 0.0
  %1186 = vmatpush1.msra.mxu0 0.0
  %1187 = vmatprep.subr.mxu0 0.0
  %1188 = vmatpush1.msra.mxu0 0.0
  %1189 = vmatprep.subr.mxu0 0.0
  %1190 = vmatpush1.msra.mxu0 0.0
  %1191 = vmatprep.subr.mxu0 0.0
  %1192 = vmatpush1.msra.mxu0 0.0
  %1193 = vmatprep.subr.mxu0 0.0
  %1194 = vmatpush1.msra.mxu0 0.0
  %1195 = vmatprep.subr.mxu0 0.0
  %1196 = vmatpush1.msra.mxu0 0.0
  %1197 = vmatprep.subr.mxu0 0.0
  %1198 = vmatpush1.msra.mxu0 0.0
  %1199 = vmatprep.subr.mxu0 0.0
  %1200 = vmatpush1.msra.mxu0 0.0
  %1201 = vmatprep.subr.mxu0 0.0
  %1202 = vmatpush1.msra.mxu0 0.0
  %1203 = vmatprep.subr.mxu0 0.0
  %1204 = vmatpush1.msra.mxu0 0.0
  %1205 = vmatprep.subr.mxu0 0.0
  %1206 = vmatpush1.msra.mxu0 0.0
  %1207 = vmatprep.subr.mxu0 0.0
  %1208 = vmatpush1.msra.mxu0 0.0
  %1209 = vmatprep.subr.mxu0 0.0
  %1210 = vmatpush1.msra.mxu0 0.0
  %1211 = vmatprep.subr.mxu0 0.0
  %1212 = vmatpush1.msra.mxu0 0.0
  %1213 = vmatprep.mubr.f32.mxu0 0.0
  %1214 = vmatmul.mubr.f32.gmra.mrb[0].mxu0 %v1138
  %v1215 = vpop.f32.mrb[0].mxu0
  %v1216 = vadd.f32 0.0, %v1215
  %v1217 = vpop.f32.mrb[0].mxu0
  %1218 = vmatprep.mubr.f32.mxu0 0.0
  %1219 = vmatmul.mubr.f32.gmra.mrb[0].mxu0 %v1141
  %v1220 = vpop.f32.mrb[0].mxu0
  %v1221 = vadd.f32 0.0, %v1220
  %v1222 = vpop.f32.mrb[0].mxu0
  %1223 = vmatprep.mubr.f32.mxu0 0.0
  %1224 = vmatmul.mubr.f32.gmra.mrb[0].mxu0 %v1144
  %v1225 = vpop.f32.mrb[0].mxu0
  %v1226 = vadd.f32 0.0, %v1225
  %v1227 = vpop.f32.mrb[0].mxu0
  %1228 = vmatprep.mubr.f32.mxu0 0.0
  %1229 = vmatmul.mubr.f32.gmra.mrb[0].mxu0 %v1147
  %v1230 = vpop.f32.mrb[0].mxu0
  %v1231 = vadd.f32 0.0, %v1230
  %v1232 = vpop.f32.mrb[0].mxu0
  %1233 = vdwg.mxu0
  %v1234 = vrcp.pop %v1127
  %v1235 = vmul.f32 %v1216, %v1234
  %v1236 = vrcp.pop %v1130
  %v1237 = vmul.f32 %v1221, %v1236
  %v1238 = vrcp.pop %v1133
  %v1239 = vmul.f32 %v1226, %v1238
  %v1240 = vrcp.pop %v1136
  %v1241 = vmul.f32 %v1231, %v1240
  %v1242 = vld [vmem:[%s3 + $0x10] sm:$0x1]
  %v1243 = vld [vmem:[%s3] sm:$0xff]
  %v1245 = vsel %vm875, %v1235, 0
  %v1248 = vsel %vm875, %v1237, 0
  %1250 = vmatprep.subr.mxu0 0.0
  %1251 = vmatpush1.msra.mxu0 %v1243
  %1252 = vmatprep.subr.mxu0 0.0
  %1253 = vmatpush1.msra.mxu0 0.0
  %1254 = vmatprep.subr.mxu0 0.0
  %1255 = vmatpush1.msra.mxu0 0.0
  %1256 = vmatprep.subr.mxu0 0.0
  %1257 = vmatpush1.msra.mxu0 0.0
  %1258 = vmatprep.subr.mxu0 0.0
  %1259 = vmatpush1.msra.mxu0 0.0
  %1260 = vmatprep.subr.mxu0 0.0
  %1261 = vmatpush1.msra.mxu0 0.0
  %1262 = vmatprep.subr.mxu0 0.0
  %1263 = vmatpush1.msra.mxu0 0.0
  %1264 = vmatprep.subr.mxu0 0.0
  %1265 = vmatpush1.msra.mxu0 0.0
  %1266 = vmatprep.subr.mxu0 0.0
  %1267 = vmatpush1.msra.mxu0 0.0
  %1268 = vmatprep.subr.mxu0 0.0
  %1269 = vmatpush1.msra.mxu0 0.0
  %1270 = vmatprep.subr.mxu0 0.0
  %1271 = vmatpush1.msra.mxu0 0.0
  %1272 = vmatprep.subr.mxu0 0.0
  %1273 = vmatpush1.msra.mxu0 0.0
  %1274 = vmatprep.subr.mxu0 0.0
  %1275 = vmatpush1.msra.mxu0 0.0
  %1276 = vmatprep.subr.mxu0 0.0
  %1277 = vmatpush1.msra.mxu0 0.0
  %1278 = vmatprep.subr.mxu0 0.0
  %1279 = vmatpush1.msra.mxu0 0.0
  %1280 = vmatprep.subr.mxu0 0.0
  %1281 = vmatpush1.msra.mxu0 0.0
  %1282 = vmatprep.subr.mxu0 0.0
  %1283 = vmatpush1.msra.mxu0 0.0
  %1284 = vmatprep.subr.mxu0 0.0
  %1285 = vmatpush1.msra.mxu0 0.0
  %1286 = vmatprep.subr.mxu0 0.0
  %1287 = vmatpush1.msra.mxu0 0.0
  %1288 = vmatprep.subr.mxu0 0.0
  %1289 = vmatpush1.msra.mxu0 0.0
  %1290 = vmatprep.subr.mxu0 0.0
  %1291 = vmatpush1.msra.mxu0 0.0
  %1292 = vmatprep.subr.mxu0 0.0
  %1293 = vmatpush1.msra.mxu0 0.0
  %1294 = vmatprep.subr.mxu0 0.0
  %1295 = vmatpush1.msra.mxu0 0.0
  %1296 = vmatprep.subr.mxu0 0.0
  %1297 = vmatpush1.msra.mxu0 0.0
  %1298 = vmatprep.subr.mxu0 0.0
  %1299 = vmatpush1.msra.mxu0 0.0
  %1300 = vmatprep.subr.mxu0 0.0
  %1301 = vmatpush1.msra.mxu0 0.0
  %1302 = vmatprep.subr.mxu0 0.0
  %1303 = vmatpush1.msra.mxu0 0.0
  %1304 = vmatprep.subr.mxu0 0.0
  %1305 = vmatpush1.msra.mxu0 0.0
  %1306 = vmatprep.subr.mxu0 0.0
  %1307 = vmatpush1.msra.mxu0 0.0
  %1308 = vmatprep.subr.mxu0 0.0
  %1309 = vmatpush1.msra.mxu0 0.0
  %1310 = vmatprep.subr.mxu0 0.0
  %1311 = vmatpush1.msra.mxu0 0.0
  %1312 = vmatprep.subr.mxu0 0.0
  %1313 = vmatpush1.msra.mxu0 0.0
  %1314 = vmatprep.mubr.f32.mxu0 0.0
  %1315 = vmatmul.mubr.f32.gmra.mrb[0].mxu0 %v1245
  %v1316 = vpop.f32.mrb[0].mxu0
  %v1317 = vadd.f32 0.0, %v1316
  %v1318 = vpop.f32.mrb[0].mxu0
  %1319 = vmatprep.mubr.f32.mxu0 0.0
  %1320 = vmatmul.mubr.f32.gmra.mrb[0].mxu0 %v1248
  %v1321 = vpop.f32.mrb[0].mxu0
  %v1322 = vadd.f32 0.0, %v1321
  %v1323 = vpop.f32.mrb[0].mxu0
  %1324 = vdwg.mxu0
  %v1325 = vlaneseq
  %v1326 = vshrl.u32 %v1325, 7
  %v1327 = vsub.s32 0, %v1326
  %v1328 = vrot.slane %v1242, %v1327
  %v1329 = vadd.f32 %v1328, %v1317
  %v1330 = vadd.f32 %v1328, %v1322
  %v1331 = vld [vmem:[%s3 + $0x8] sm:$0xff]
  %v1333 = vsel %vm875, %v1239, 0
  %v1336 = vsel %vm875, %v1241, 0
  %1338 = vmatprep.subr.mxu0 0.0
  %1339 = vmatpush1.msra.mxu0 %v1331
  %1340 = vmatprep.subr.mxu0 0.0
  %1341 = vmatpush1.msra.mxu0 0.0
  %1342 = vmatprep.subr.mxu0 0.0
  %1343 = vmatpush1.msra.mxu0 0.0
  %1344 = vmatprep.subr.mxu0 0.0
  %1345 = vmatpush1.msra.mxu0 0.0
  %1346 = vmatprep.subr.mxu0 0.0
  %1347 = vmatpush1.msra.mxu0 0.0
  %1348 = vmatprep.subr.mxu0 0.0
  %1349 = vmatpush1.msra.mxu0 0.0
  %1350 = vmatprep.subr.mxu0 0.0
  %1351 = vmatpush1.msra.mxu0 0.0
  %1352 = vmatprep.subr.mxu0 0.0
  %1353 = vmatpush1.msra.mxu0 0.0
  %1354 = vmatprep.subr.mxu0 0.0
  %1355 = vmatpush1.msra.mxu0 0.0
  %1356 = vmatprep.subr.mxu0 0.0
  %1357 = vmatpush1.msra.mxu0 0.0
  %1358 = vmatprep.subr.mxu0 0.0
  %1359 = vmatpush1.msra.mxu0 0.0
  %1360 = vmatprep.subr.mxu0 0.0
  %1361 = vmatpush1.msra.mxu0 0.0
  %1362 = vmatprep.subr.mxu0 0.0
  %1363 = vmatpush1.msra.mxu0 0.0
  %1364 = vmatprep.subr.mxu0 0.0
  %1365 = vmatpush1.msra.mxu0 0.0
  %1366 = vmatprep.subr.mxu0 0.0
  %1367 = vmatpush1.msra.mxu0 0.0
  %1368 = vmatprep.subr.mxu0 0.0
  %1369 = vmatpush1.msra.mxu0 0.0
  %1370 = vmatprep.subr.mxu0 0.0
  %1371 = vmatpush1.msra.mxu0 0.0
  %1372 = vmatprep.subr.mxu0 0.0
  %1373 = vmatpush1.msra.mxu0 0.0
  %1374 = vmatprep.subr.mxu0 0.0
  %1375 = vmatpush1.msra.mxu0 0.0
  %1376 = vmatprep.subr.mxu0 0.0
  %1377 = vmatpush1.msra.mxu0 0.0
  %1378 = vmatprep.subr.mxu0 0.0
  %1379 = vmatpush1.msra.mxu0 0.0
  %1380 = vmatprep.subr.mxu0 0.0
  %1381 = vmatpush1.msra.mxu0 0.0
  %1382 = vmatprep.subr.mxu0 0.0
  %1383 = vmatpush1.msra.mxu0 0.0
  %1384 = vmatprep.subr.mxu0 0.0
  %1385 = vmatpush1.msra.mxu0 0.0
  %1386 = vmatprep.subr.mxu0 0.0
  %1387 = vmatpush1.msra.mxu0 0.0
  %1388 = vmatprep.subr.mxu0 0.0
  %1389 = vmatpush1.msra.mxu0 0.0
  %1390 = vmatprep.subr.mxu0 0.0
  %1391 = vmatpush1.msra.mxu0 0.0
  %1392 = vmatprep.subr.mxu0 0.0
  %1393 = vmatpush1.msra.mxu0 0.0
  %1394 = vmatprep.subr.mxu0 0.0
  %1395 = vmatpush1.msra.mxu0 0.0
  %1396 = vmatprep.subr.mxu0 0.0
  %1397 = vmatpush1.msra.mxu0 0.0
  %1398 = vmatprep.subr.mxu0 0.0
  %1399 = vmatpush1.msra.mxu0 0.0
  %1400 = vmatprep.subr.mxu0 0.0
  %1401 = vmatpush1.msra.mxu0 0.0
  %1402 = vmatprep.mubr.f32.mxu0 0.0
  %1403 = vmatmul.mubr.f32.gmra.mrb[0].mxu0 %v1333
  %v1404 = vpop.f32.mrb[0].mxu0
  %v1405 = vadd.f32 0.0, %v1404
  %v1406 = vpop.f32.mrb[0].mxu0
  %1407 = vmatprep.mubr.f32.mxu0 0.0
  %1408 = vmatmul.mubr.f32.gmra.mrb[0].mxu0 %v1336
  %v1409 = vpop.f32.mrb[0].mxu0
  %v1410 = vadd.f32 0.0, %v1409
  %v1411 = vpop.f32.mrb[0].mxu0
  %1412 = vdwg.mxu0
  %v1413 = vadd.f32 %v1329, %v1405
  %v1414 = vadd.f32 %v1330, %v1410
  %vm1415 = vcmask 130048
  %1416 = vst.msk [vmem:[%s4] sm:$0xff] %vm1415, %v1413
  %1417 = vst.msk [vmem:[%s4 + $0x8] sm:$0xff] %vm1415, %v1414
  // Predicated region
  $region18: #{_forward_impl.1} parent=0 // pred_check
    _
  $region19: #{_forward_impl.1} parent=0 // pred_check_branch
    %1419 = sbr.rel (0) target = $region21
  $region20: #{_forward_impl.1} parent=0 // pred_region
    _
  $region21: #{_forward_impl.1} parent=0 // pred_fallthru
    _
  // Predicated region
  $region22: #{_forward_impl.1} parent=0 // pred_check
    _
  $region23: #{_forward_impl.1} parent=0 // pred_check_branch
    %1421 = sbr.rel (0) target = $region25
  $region24: #{_forward_impl.1} parent=0 // pred_region
    _
  $region25: #{_forward_impl.1} parent=0 // pred_fallthru
    _

</llo_original>
